<compile_context>
chip_gen: v7x
topology: tpu7x:2x2x1
jax: 0.10.0
libtpu: 0.0.40
codegen_flags: <defaults>
</compile_context>

<pallas_src>
import functools

import jax
import jax.numpy as jnp
from jax.experimental import pallas as pl
from jax.experimental.pallas import tpu as pltpu


def _part_attention_kernel(xT_ref, mask_ref, wqkv_ref, wproj_ref, bproj_ref,
                           oT_ref, qkvT_s, ctxT_s, *, num_heads, head_dim):
    """One (batch, head) grid step.

    xT_ref:    (1, C, N)  input, channels-major            [compute dtype]
    mask_ref:  (N, N)     part mask (rows = queries, cols = keys)  [float32]
    wqkv_ref:  (3C, C)    fused qkv weight, torch (out, in) layout, q rows pre-scaled
    wproj_ref: (C, C)     proj weight, torch (out, in) layout
    bproj_ref: (C, 1)     proj bias                        [float32]
    oT_ref:    (1, C, N)  output, channels-major
    qkvT_s:    (3C, N)    VMEM scratch: qkv^T of the current batch element
    ctxT_s:    (C, N)     VMEM scratch: merged per-head context (transposed)
    """
    h = pl.program_id(1)
    C = num_heads * head_dim
    cdt = qkvT_s.dtype

    # ---- once per batch element: fused QKV projection (full-width MXU matmul).
    @pl.when(h == 0)
    def _():
        qkvT_s[...] = jnp.dot(
            wqkv_ref[...], xT_ref[0],
            preferred_element_type=jnp.float32).astype(cdt)

    # ---- per-head attention; head slices are sublane ranges at full lane width.
    q_rows = pl.multiple_of(h * head_dim, head_dim)
    k_rows = pl.multiple_of(C + h * head_dim, head_dim)
    v_rows = pl.multiple_of(2 * C + h * head_dim, head_dim)

    qT = qkvT_s[pl.ds(q_rows, head_dim), :]          # (hd, N)
    kT = qkvT_s[pl.ds(k_rows, head_dim), :]          # (hd, N)
    vT = qkvT_s[pl.ds(v_rows, head_dim), :]          # (hd, N)

    # scores = q @ k^T   (softmax scale already folded into the q weights).
    q = qT.T                                         # (N, hd) tiny 2-D transpose
    s = jnp.dot(q, kT, preferred_element_type=jnp.float32)      # (N, N) f32

    mask = mask_ref[...]                             # (N, N) f32
    # masked_fill(~mask.bool(), -1000.0) applied to the scaled logits.
    s = jnp.where(mask != 0.0, s, -1000.0)

    # numerically stable softmax in f32; reciprocal runs on the EUP.
    s = s - jnp.max(s, axis=-1, keepdims=True)
    e = jnp.exp(s)
    attn = e * pl.reciprocal(jnp.sum(e, axis=-1, keepdims=True), approx=True)
    # post-softmax multiplicative mask, then drop to compute dtype for the MXU.
    attn = (attn * mask).astype(cdt)
    # attn_drop is identity (p = 0.0).

    # context rows (transposed): ctxT[d, q] = sum_k vT[d, k] * attn[q, k]
    ctxT_s[pl.ds(q_rows, head_dim), :] = jax.lax.dot_general(
        vT, attn, (((1,), (1,)), ((), ())),
        preferred_element_type=jnp.float32).astype(cdt)

    # ---- once per batch element: fused output projection + bias.
    @pl.when(h == num_heads - 1)
    def _():
        outT = jnp.dot(wproj_ref[...], ctxT_s[...],
                       preferred_element_type=jnp.float32)       # (C, N) f32
        oT_ref[0] = (outT + bproj_ref[...]).astype(oT_ref.dtype)
        # proj_drop is identity (p = 0.0).


def part_attention_forward(x, mask, w_qkv, w_proj, b_proj, *,
                           num_heads, qk_scale=None, compute_dtype=None):
    """x: (B, N, C); mask: (N, N) (broadcast over batch & heads);
    w_qkv: (3C, C); w_proj: (C, C); b_proj: (C,).  Returns (B, N, C)."""
    B, N, C = x.shape
    assert C % num_heads == 0, "dim must be divisible by num_heads"
    head_dim = C // num_heads
    scale = qk_scale if qk_scale is not None else head_dim ** -0.5
    cdt = jnp.dtype(compute_dtype) if compute_dtype is not None else x.dtype
    out_dtype = x.dtype

    # Fold the softmax scale into the q rows of the fused qkv weight (free).
    w_qkv32 = w_qkv.astype(jnp.float32)
    w_qkv_scaled = jnp.concatenate([w_qkv32[:C] * scale, w_qkv32[C:]], axis=0)

    # Host-side (XLA) layout prep: channels-major input, compute-dtype weights.
    xT = jnp.swapaxes(x, 1, 2).astype(cdt)             # (B, C, N)
    wqkv = w_qkv_scaled.astype(cdt)                    # (3C, C)
    wproj = w_proj.astype(cdt)                         # (C, C)
    bproj = b_proj.astype(jnp.float32).reshape(C, 1)   # (C, 1)
    maskf = mask.astype(jnp.float32).reshape(N, N)     # (N, N)

    kernel = functools.partial(_part_attention_kernel,
                               num_heads=num_heads, head_dim=head_dim)

    outT = pl.pallas_call(
        kernel,
        out_shape=jax.ShapeDtypeStruct((B, C, N), out_dtype),
        grid=(B, num_heads),
        in_specs=[
            pl.BlockSpec((1, C, N), lambda b, h: (b, 0, 0)),    # x^T (stays resident across heads)
            pl.BlockSpec((N, N), lambda b, h: (0, 0)),          # mask (resident)
            pl.BlockSpec((3 * C, C), lambda b, h: (0, 0)),      # fused qkv weight (resident)
            pl.BlockSpec((C, C), lambda b, h: (0, 0)),          # proj weight (resident)
            pl.BlockSpec((C, 1), lambda b, h: (0, 0)),          # proj bias
        ],
        out_specs=pl.BlockSpec((1, C, N), lambda b, h: (b, 0, 0)),
        scratch_shapes=[
            pltpu.VMEM((3 * C, N), cdt),   # qkv^T of the current batch element
            pltpu.VMEM((C, N), cdt),       # merged per-head context (transposed)
        ],
        compiler_params=pltpu.CompilerParams(
            dimension_semantics=("parallel", "arbitrary"),
            vmem_limit_bytes=48 * 1024 * 1024),
    )(xT, maskf, wqkv, wproj, bproj)

    return jnp.swapaxes(outT, 1, 2)                    # (B, N, C)


def part_attention_reference(x, mask, w_qkv, w_proj, b_proj, *,
                             num_heads, qk_scale=None):
    """Pure-JAX f32 reference mirroring the PyTorch forward."""
    B, N, C = x.shape
    hd = C // num_heads
    scale = qk_scale if qk_scale is not None else hd ** -0.5
    qkv = x @ w_qkv.T                                      # (B, N, 3C), no bias
    qkv = qkv.reshape(B, N, 3, num_heads, hd).transpose(2, 0, 3, 1, 4)
    q, k, v = qkv[0], qkv[1], qkv[2]                       # (B, H, N, hd)
    attn = (q @ jnp.swapaxes(k, -2, -1)) * scale           # (B, H, N, N)
    attn = jnp.where(mask[None, None] != 0, attn, -1000.0)
    attn = jax.nn.softmax(attn, axis=-1)
    attn = attn * mask[None, None]
    out = (attn @ v).transpose(0, 2, 1, 3).reshape(B, N, C)
    return out @ w_proj.T + b_proj


if __name__ == "__main__":
    # Small but lane-aligned shapes: B=2, N=128 tokens, C=128, 8 heads (hd=16).
    B, N, C, NUM_HEADS = 2, 128, 128, 8

    key = jax.random.PRNGKey(0)
    kx, kq, kp, kb = jax.random.split(key, 4)

    x = jax.random.normal(kx, (B, N, C), dtype=jnp.float32)
    w_qkv = 0.1 * jax.random.normal(kq, (3 * C, C), dtype=jnp.float32)   # nn.Linear(dim, 3*dim, bias=False)
    w_proj = 0.1 * jax.random.normal(kp, (C, C), dtype=jnp.float32)      # nn.Linear(dim, dim)
    b_proj = 0.1 * jax.random.normal(kb, (C,), dtype=jnp.float32)

    # "Part" mask: block-diagonal over 4 parts of 32 tokens each, broadcast
    # over batch and heads (1 = attend within part, 0 = masked out).
    part_id = jnp.arange(N) // 32
    mask = (part_id[:, None] == part_id[None, :]).astype(jnp.float32)

    ref = part_attention_reference(x, mask, w_qkv, w_proj, b_proj,
                                   num_heads=NUM_HEADS)

    # --- f32 compute path (tight correctness check) -------------------------
    out_f32 = jax.block_until_ready(
        part_attention_forward(x, mask, w_qkv, w_proj, b_proj,
                               num_heads=NUM_HEADS))
    assert out_f32.shape == (B, N, C)
    assert jnp.allclose(out_f32, ref, atol=1e-2, rtol=1e-2), \
        "f32 kernel mismatch vs reference"

    # --- bf16 operand / f32 accumulation path (MXU-friendly, loose check) ---
    out_bf16 = jax.block_until_ready(
        part_attention_forward(x, mask, w_qkv, w_proj, b_proj,
                               num_heads=NUM_HEADS,
                               compute_dtype=jnp.bfloat16))
    assert out_bf16.shape == (B, N, C)
    diff = jnp.abs(out_bf16.astype(jnp.float32) - ref)
    assert float(jnp.mean(diff)) < 3e-2 and float(jnp.max(diff)) < 3.5e-1, \
        "bf16 kernel mismatch vs reference"

    print("KERNEL_OK")
</pallas_src>

<mosaic_0001>
module attributes {stable_mosaic.version = 11 : i64} {
  func.func @_part_attention_kernel(%arg0: i32, %arg1: i32, %arg2: memref<1x128x128xf32, #tpu.memory_space<vmem>>, %arg3: memref<128x128xf32, #tpu.memory_space<vmem>>, %arg4: memref<384x128xf32, #tpu.memory_space<vmem>>, %arg5: memref<128x128xf32, #tpu.memory_space<vmem>>, %arg6: memref<128x1xf32, #tpu.memory_space<vmem>>, %arg7: memref<1x128x128xf32, #tpu.memory_space<vmem>>, %arg8: memref<384x128xf32, #tpu.memory_space<vmem>>, %arg9: memref<128x128xf32, #tpu.memory_space<vmem>>) attributes {dimension_semantics = [#tpu.dimension_semantics<parallel>, #tpu.dimension_semantics<arbitrary>], iteration_bounds = array<i64: 2, 8>, scalar_prefetch = 0 : i64, scratch_operands = 2 : i64, tpu.core_type = #tpu.core_type<tc>, window_params = [{transform_indices = @transform_0, window_bounds = array<i64: 1, 128, 128>}, {pipeline_mode = #tpu.pipeline_mode<synchronous>, transform_indices = @transform_1, window_bounds = array<i64: 128, 128>}, {pipeline_mode = #tpu.pipeline_mode<synchronous>, transform_indices = @transform_2, window_bounds = array<i64: 384, 128>}, {pipeline_mode = #tpu.pipeline_mode<synchronous>, transform_indices = @transform_3, window_bounds = array<i64: 128, 128>}, {pipeline_mode = #tpu.pipeline_mode<synchronous>, transform_indices = @transform_4, window_bounds = array<i64: 128, 1>}, {transform_indices = @transform_5, window_bounds = array<i64: 1, 128, 128>}]} {
    %c0_i32 = arith.constant 0 : i32
    %0 = arith.cmpi eq, %arg1, %c0_i32 : i32
    %1 = arith.extui %0 : i1 to i32
    %c0_i32_0 = arith.constant 0 : i32
    %2 = arith.cmpi ne, %1, %c0_i32_0 : i32
    scf.if %2 {
      %c0_14 = arith.constant 0 : index
      %c0_15 = arith.constant 0 : index
      %41 = vector.load %arg4[%c0_14, %c0_15] : memref<384x128xf32, #tpu.memory_space<vmem>>, vector<384x128xf32>
      %c0_16 = arith.constant 0 : index
      %c0_17 = arith.constant 0 : index
      %c0_18 = arith.constant 0 : index
      %42 = vector.load %arg2[%c0_16, %c0_17, %c0_18] : memref<1x128x128xf32, #tpu.memory_space<vmem>>, vector<1x128x128xf32>
      %43 = vector.shape_cast %42 : vector<1x128x128xf32> to vector<128x128xf32>
      %cst_19 = arith.constant dense<0.000000e+00> : vector<384x128xf32>
      %44 = tpu.matmul %41, %43, %cst_19 {dimension_numbers = #tpu.dot_dimension_numbers<[1], [0], [0], [1], [0, 0, 1, 1], [], []>} : vector<384x128xf32>, vector<128x128xf32>, vector<384x128xf32> -> vector<384x128xf32>
      %c0_20 = arith.constant 0 : index
      %c0_21 = arith.constant 0 : index
      %45 = vector.load %arg8[%c0_20, %c0_21] : memref<384x128xf32, #tpu.memory_space<vmem>>, vector<384x128xf32>
      tpu.vector_store %arg8[%c0_20, %c0_21], %44 {strides = array<i32>} : memref<384x128xf32, #tpu.memory_space<vmem>>, vector<384x128xf32>,
    } else {
    }
    %c16_i32 = arith.constant 16 : i32
    %3 = arith.muli %arg1, %c16_i32 : i32
    %4 = tpu.assume_multiple %3, 16 : i32
    %c16_i32_1 = arith.constant 16 : i32
    %5 = arith.muli %arg1, %c16_i32_1 : i32
    %c128_i32 = arith.constant 128 : i32
    %6 = arith.addi %c128_i32, %5 : i32
    %7 = tpu.assume_multiple %6, 16 : i32
    %c16_i32_2 = arith.constant 16 : i32
    %8 = arith.muli %arg1, %c16_i32_2 : i32
    %c256_i32 = arith.constant 256 : i32
    %9 = arith.addi %c256_i32, %8 : i32
    %10 = tpu.assume_multiple %9, 16 : i32
    %11 = arith.index_cast %4 : i32 to index
    %c0 = arith.constant 0 : index
    %12 = vector.load %arg8[%11, %c0] : memref<384x128xf32, #tpu.memory_space<vmem>>, vector<16x128xf32>
    %13 = arith.index_cast %7 : i32 to index
    %c0_3 = arith.constant 0 : index
    %14 = vector.load %arg8[%13, %c0_3] : memref<384x128xf32, #tpu.memory_space<vmem>>, vector<16x128xf32>
    %15 = arith.index_cast %10 : i32 to index
    %c0_4 = arith.constant 0 : index
    %16 = vector.load %arg8[%15, %c0_4] : memref<384x128xf32, #tpu.memory_space<vmem>>, vector<16x128xf32>
    %17 = tpu.transpose %12, [1, 0] : vector<16x128xf32> -> vector<128x16xf32>
    %cst = arith.constant dense<0.000000e+00> : vector<128x128xf32>
    %18 = tpu.matmul %17, %14, %cst {dimension_numbers = #tpu.dot_dimension_numbers<[1], [0], [0], [1], [0, 0, 1, 1], [], []>} : vector<128x16xf32>, vector<16x128xf32>, vector<128x128xf32> -> vector<128x128xf32>
    %c0_5 = arith.constant 0 : index
    %c0_6 = arith.constant 0 : index
    %19 = vector.load %arg3[%c0_5, %c0_6] : memref<128x128xf32, #tpu.memory_space<vmem>>, vector<128x128xf32>
    %cst_7 = arith.constant 0.000000e+00 : f32
    %20 = vector.broadcast %cst_7 : f32 to vector<128x128xf32>
    %21 = arith.cmpf one, %19, %20 : vector<128x128xf32>
    %cst_8 = arith.constant -1.000000e+03 : f32
    %22 = vector.broadcast %cst_8 : f32 to vector<128x128xf32>
    %23 = arith.select %21, %18, %22 : vector<128x128xi1>, vector<128x128xf32>
    %cst_9 = arith.constant dense<0xFF800000> : vector<128xf32>
    %24 = vector.multi_reduction <maximumf>, %23, %cst_9 [1] : vector<128x128xf32> to vector<128xf32>
    %25 = vector.shape_cast %24 : vector<128xf32> to vector<128x1xf32>
    %26 = vector.broadcast %25 : vector<128x1xf32> to vector<128x128xf32>
    %27 = arith.subf %23, %26 : vector<128x128xf32>
    %28 = math.exp %27 : vector<128x128xf32>
    %cst_10 = arith.constant dense<0.000000e+00> : vector<128xf32>
    %29 = vector.multi_reduction <add>, %28, %cst_10 [1] : vector<128x128xf32> to vector<128xf32>
    %30 = vector.shape_cast %29 : vector<128xf32> to vector<128x1xf32>
    %31 = tpu.reciprocal %30 {approx = true} : vector<128x1xf32> -> vector<128x1xf32>
    %32 = vector.broadcast %31 : vector<128x1xf32> to vector<128x128xf32>
    %33 = arith.mulf %28, %32 : vector<128x128xf32>
    %34 = arith.mulf %33, %19 : vector<128x128xf32>
    %cst_11 = arith.constant dense<0.000000e+00> : vector<16x128xf32>
    %35 = tpu.matmul %16, %34, %cst_11 {dimension_numbers = #tpu.dot_dimension_numbers<[1], [1], [0], [0], [0, 0, 1, 0], [], []>} : vector<16x128xf32>, vector<128x128xf32>, vector<16x128xf32> -> vector<16x128xf32>
    %36 = arith.index_cast %4 : i32 to index
    %c0_12 = arith.constant 0 : index
    %37 = vector.load %arg9[%36, %c0_12] : memref<128x128xf32, #tpu.memory_space<vmem>>, vector<16x128xf32>
    tpu.vector_store %arg9[%36, %c0_12], %35 {strides = array<i32>} : memref<128x128xf32, #tpu.memory_space<vmem>>, vector<16x128xf32>,
    %c7_i32 = arith.constant 7 : i32
    %38 = arith.cmpi eq, %arg1, %c7_i32 : i32
    %39 = arith.extui %38 : i1 to i32
    %c0_i32_13 = arith.constant 0 : i32
    %40 = arith.cmpi ne, %39, %c0_i32_13 : i32
    scf.if %40 {
      %c0_14 = arith.constant 0 : index
      %c0_15 = arith.constant 0 : index
      %41 = vector.load %arg5[%c0_14, %c0_15] : memref<128x128xf32, #tpu.memory_space<vmem>>, vector<128x128xf32>
      %c0_16 = arith.constant 0 : index
      %c0_17 = arith.constant 0 : index
      %42 = vector.load %arg9[%c0_16, %c0_17] : memref<128x128xf32, #tpu.memory_space<vmem>>, vector<128x128xf32>
      %cst_18 = arith.constant dense<0.000000e+00> : vector<128x128xf32>
      %43 = tpu.matmul %41, %42, %cst_18 {dimension_numbers = #tpu.dot_dimension_numbers<[1], [0], [0], [1], [0, 0, 1, 1], [], []>} : vector<128x128xf32>, vector<128x128xf32>, vector<128x128xf32> -> vector<128x128xf32>
      %c0_19 = arith.constant 0 : index
      %c0_20 = arith.constant 0 : index
      %44 = vector.load %arg6[%c0_19, %c0_20] : memref<128x1xf32, #tpu.memory_space<vmem>>, vector<128x1xf32>
      %45 = vector.broadcast %44 : vector<128x1xf32> to vector<128x128xf32>
      %46 = arith.addf %43, %45 : vector<128x128xf32>
      %c0_21 = arith.constant 0 : index
      %c0_22 = arith.constant 0 : index
      %c0_23 = arith.constant 0 : index
      %47 = vector.load %arg7[%c0_21, %c0_22, %c0_23] : memref<1x128x128xf32, #tpu.memory_space<vmem>>, vector<1x128x128xf32>
      %48 = vector.shape_cast %47 : vector<1x128x128xf32> to vector<128x128xf32>
      %49 = vector.shape_cast %46 : vector<128x128xf32> to vector<1x128x128xf32>
      tpu.vector_store %arg7[%c0_21, %c0_22, %c0_23], %49 {strides = array<i32>} : memref<1x128x128xf32, #tpu.memory_space<vmem>>, vector<1x128x128xf32>,
    } else {
    }
    return
  }
  func.func @transform_0(%arg0: i32, %arg1: i32) -> (i32, i32, i32) {
    %c0_i32 = arith.constant 0 : i32
    %c0_i32_0 = arith.constant 0 : i32
    %c0_i32_1 = arith.constant 0 : i32
    return %arg0, %c0_i32, %c0_i32_0 : i32, i32, i32
  }
  func.func @transform_1(%arg0: i32, %arg1: i32) -> (i32, i32) {
    %c0_i32 = arith.constant 0 : i32
    %c0_i32_0 = arith.constant 0 : i32
    %c0_i32_1 = arith.constant 0 : i32
    return %c0_i32, %c0_i32_0 : i32, i32
  }
  func.func @transform_2(%arg0: i32, %arg1: i32) -> (i32, i32) {
    %c0_i32 = arith.constant 0 : i32
    %c0_i32_0 = arith.constant 0 : i32
    %c0_i32_1 = arith.constant 0 : i32
    return %c0_i32, %c0_i32_0 : i32, i32
  }
  func.func @transform_3(%arg0: i32, %arg1: i32) -> (i32, i32) {
    %c0_i32 = arith.constant 0 : i32
    %c0_i32_0 = arith.constant 0 : i32
    %c0_i32_1 = arith.constant 0 : i32
    return %c0_i32, %c0_i32_0 : i32, i32
  }
  func.func @transform_4(%arg0: i32, %arg1: i32) -> (i32, i32) {
    %c0_i32 = arith.constant 0 : i32
    %c0_i32_0 = arith.constant 0 : i32
    %c0_i32_1 = arith.constant 0 : i32
    return %c0_i32, %c0_i32_0 : i32, i32
  }
  func.func @transform_5(%arg0: i32, %arg1: i32) -> (i32, i32, i32) {
    %c0_i32 = arith.constant 0 : i32
    %c0_i32_0 = arith.constant 0 : i32
    %c0_i32_1 = arith.constant 0 : i32
    return %arg0, %c0_i32, %c0_i32_0 : i32, i32, i32
  }
}

</mosaic_0001>

<llo_original>
// kernel: tpu_custom_call.1
$region0: #{tpu_custom_call.1}
  #allocation0 [shape = 'u32[]', space=smem, size = 0x4, offset = 0x4, fixed_abs, tag = 'smem constant byte address 0x4 - core index']
  #allocation1 [shape = 'u32[144,128]{1,0:T(1,128)}', space=vmem, size = 0x12000, scoped, tag = 'internal scratch']
  #allocation2 [shape = 'f32[384,128]{1,0:T(8,128)}', space=vmem, size = 0x30000, scoped, tag = 'scratch operand']
  #allocation3 [shape = 'f32[128,128]{1,0:T(8,128)}', space=vmem, size = 0x10000, scoped, tag = 'scratch operand']
  %s0 = inlined_call_operand.hbm [shape: f32[2,128,128], index: 0, kind: input, shape index: {}]
  %s1 = inlined_call_operand.vmem [shape: f32[128,128], index: 1, kind: input, shape index: {}]
  %s2 = inlined_call_operand.hbm [shape: f32[384,128], index: 2, kind: input, shape index: {}]
  %s3 = inlined_call_operand.hbm [shape: f32[128,128], index: 3, kind: input, shape index: {}]
  %s4 = inlined_call_operand.vmem [shape: f32[128,1], index: 4, kind: input, shape index: {}]
  %s5 = inlined_call_operand.hbm [shape: f32[2,128,128], index: 5, kind: output, shape index: {}]
  %s6 = sld [smem:[#allocation0]]
  $region73: #{tpu_custom_call.1} parent=0
    _
  %s8 = ssub.s32 1, %s6
  %s9 = scalar_select 0, %s8, %s6
  $region1: #{tpu_custom_call.1} parent=0
    #allocation4 [shape = 'u8[131072]{0}', space=vmem, size = 0x20000, scoped, tag = 'input window, operand 0']
    #allocation5 [shape = 's32[2]{0}', space=sflag, size = 0x8, scoped, tag = 'scoped memory for tpu_custom_call.1']
    #allocation6 [shape = 's32[2]{0}', space=sflag, size = 0x8, scoped, tag = 'scoped memory for tpu_custom_call.1']
    #allocation7 [shape = 'u8[196608]{0}', space=vmem, size = 0x30000, scoped, tag = 'input window, operand 2, single buffered']
    #allocation8 [shape = 's32[1]{0}', space=sflag, size = 0x4, scoped, tag = 'scoped memory for tpu_custom_call.1']
    #allocation9 [shape = 'u8[65536]{0}', space=vmem, size = 0x10000, scoped, tag = 'input window, operand 3, single buffered']
    #allocation10 [shape = 'u8[131072]{0}', space=vmem, size = 0x20000, scoped, tag = 'output window, operand 0']
    %10 = vsyncpa [#allocation5], 0
    %s11 = scalar_lea.sflag [#allocation5], 1
    %12 = vsyncpa %s11, 0
    %13 = vsyncpa [#allocation8], 0
    %14 = vsyncpa [#allocation6], 0
    %s15 = scalar_lea.sflag [#allocation6], 1
    %16 = vsyncpa %s15, 0
    loop: start=0, step=1, limit=18
    $region2: #{tpu_custom_call.1} parent=1 // loop_pre_header
      _
    $region3: #{tpu_custom_call.1} parent=1 // loop_header
      %s18 = sphi 0, %s22
      %p19 = scmp.ge.s32.totalorder %s18, 18
      %s25 = sphi 0, %s37
      %s26 = sphi 0, %s33
      %s27 = sphi 0, %s25
      %s28 = sphi 0, %s26
      %s29 = sphi 0, %s27
      %s30 = sphi 0, %s28
      %s40 = sphi 0, %s42
      %s43 = sphi 0, %s40
      %s44 = sphi 0, %s43
      %s60 = sphi 0, %s44
      %s64 = sphi 0, %s64
      %s66 = sphi 0, %s64
      %s67 = sphi 0, %s66
      %s81 = sphi 0, %s67
      %s85 = sphi 0, %s85
      %s87 = sphi 0, %s85
      %s88 = sphi 0, %s87
      %s102 = sphi 0, %s88
      %s106 = sphi 0, %s106
      %s108 = sphi 0, %s106
      %s109 = sphi 0, %s108
      %s123 = sphi 0, %s109
      %s127 = sphi 0, %s127
      %s129 = sphi 0, %s127
      %s130 = sphi 0, %s129
      %s144 = sphi 0, %s130
      %s150 = sphi 0, %s152
      %s153 = sphi 0, %s150
      %s154 = sphi 0, %s153
      %s170 = sphi 0, %s154
    $region4: #{tpu_custom_call.1} parent=1 // loop_header_branch
      %21 = sbr.rel (%p19) target = $region8
    $region5: #{tpu_custom_call.1} parent=1 // loop_body
      %s23 = ssub.s32 %s18, 1
      %s24 = ssub.s32 %s18, 2
      %s31 = sadd.s32 1, %s26
      %p32 = scmp.ge.s32.totalorder %s31, 8
      %s33 = scalar_select %p32, 0, %s31
      %s34 = sadd.s32 1, %s25
      %s35 = scalar_select %p32, %s34, %s25
      %p36 = scmp.ge.s32.totalorder %s35, 2
      %s37 = scalar_select %p36, 0, %s35
      %s38 = ssub.s32 %s25, %s37
      %p39 = scmp.eq.s32.totalorder %s38, 0
      %s41 = sadd.s32 %s40, 1
      %s42 = scalar_select %p39, %s40, %s41
      %p45 = pneg %p39
      %p46 = scmp.eq.s32.totalorder %s18, 15
      %p47 = por %p45, %p46
      %p48 = scmp.ne.s32.totalorder %s40, %s43
      %p49 = scmp.eq.s32.totalorder %s18, 0
      %p50 = por %p48, %p49
      %p51 = scmp.ne.s32.totalorder %s40, %s43
      %p52 = scmp.eq.s32.totalorder %s23, 15
      %p53 = por %p51, %p52
      %p54 = scmp.ne.s32.totalorder %s43, %s44
      %p55 = scmp.eq.s32.totalorder %s23, 0
      %p56 = por %p54, %p55
      %p57 = scmp.ne.s32.totalorder %s43, %s44
      %p58 = scmp.eq.s32.totalorder %s24, 15
      %p59 = por %p57, %p58
      %p61 = scmp.ne.s32.totalorder %s44, %s60
      %p62 = scmp.eq.s32.totalorder %s24, 0
      %p63 = por %p61, %p62
      %s65 = sadd.s32 %s64, 1
      %p68 = scmp.eq.s32.totalorder %s18, 15
      %p69 = scmp.ne.s32.totalorder %s64, %s66
      %p70 = scmp.eq.s32.totalorder %s18, 0
      %p71 = por %p69, %p70
      %p72 = scmp.ne.s32.totalorder %s64, %s66
      %p73 = scmp.eq.s32.totalorder %s23, 15
      %p74 = por %p72, %p73
      %p75 = scmp.ne.s32.totalorder %s66, %s67
      %p76 = scmp.eq.s32.totalorder %s23, 0
      %p77 = por %p75, %p76
      %p78 = scmp.ne.s32.totalorder %s66, %s67
      %p79 = scmp.eq.s32.totalorder %s24, 15
      %p80 = por %p78, %p79
      %p82 = scmp.ne.s32.totalorder %s67, %s81
      %p83 = scmp.eq.s32.totalorder %s24, 0
      %p84 = por %p82, %p83
      %s86 = sadd.s32 %s85, 1
      %p89 = scmp.eq.s32.totalorder %s18, 15
      %p90 = scmp.ne.s32.totalorder %s85, %s87
      %p91 = scmp.eq.s32.totalorder %s18, 0
      %p92 = por %p90, %p91
      %p93 = scmp.ne.s32.totalorder %s85, %s87
      %p94 = scmp.eq.s32.totalorder %s23, 15
      %p95 = por %p93, %p94
      %p96 = scmp.ne.s32.totalorder %s87, %s88
      %p97 = scmp.eq.s32.totalorder %s23, 0
      %p98 = por %p96, %p97
      %p99 = scmp.ne.s32.totalorder %s87, %s88
      %p100 = scmp.eq.s32.totalorder %s24, 15
      %p101 = por %p99, %p100
      %p103 = scmp.ne.s32.totalorder %s88, %s102
      %p104 = scmp.eq.s32.totalorder %s24, 0
      %p105 = por %p103, %p104
      %s107 = sadd.s32 %s106, 1
      %p110 = scmp.eq.s32.totalorder %s18, 15
      %p111 = scmp.ne.s32.totalorder %s106, %s108
      %p112 = scmp.eq.s32.totalorder %s18, 0
      %p113 = por %p111, %p112
      %p114 = scmp.ne.s32.totalorder %s106, %s108
      %p115 = scmp.eq.s32.totalorder %s23, 15
      %p116 = por %p114, %p115
      %p117 = scmp.ne.s32.totalorder %s108, %s109
      %p118 = scmp.eq.s32.totalorder %s23, 0
      %p119 = por %p117, %p118
      %p120 = scmp.ne.s32.totalorder %s108, %s109
      %p121 = scmp.eq.s32.totalorder %s24, 15
      %p122 = por %p120, %p121
      %p124 = scmp.ne.s32.totalorder %s109, %s123
      %p125 = scmp.eq.s32.totalorder %s24, 0
      %p126 = por %p124, %p125
      %s128 = sadd.s32 %s127, 1
      %p131 = scmp.eq.s32.totalorder %s18, 15
      %p132 = scmp.ne.s32.totalorder %s127, %s129
      %p133 = scmp.eq.s32.totalorder %s18, 0
      %p134 = por %p132, %p133
      %p135 = scmp.ne.s32.totalorder %s127, %s129
      %p136 = scmp.eq.s32.totalorder %s23, 15
      %p137 = por %p135, %p136
      %p138 = scmp.ne.s32.totalorder %s129, %s130
      %p139 = scmp.eq.s32.totalorder %s23, 0
      %p140 = por %p138, %p139
      %p141 = scmp.ne.s32.totalorder %s129, %s130
      %p142 = scmp.eq.s32.totalorder %s24, 15
      %p143 = por %p141, %p142
      %p145 = scmp.ne.s32.totalorder %s130, %s144
      %p146 = scmp.eq.s32.totalorder %s24, 0
      %p147 = por %p145, %p146
      %s148 = ssub.s32 %s25, %s37
      %p149 = scmp.eq.s32.totalorder %s148, 0
      %s151 = sadd.s32 %s150, 1
      %s152 = scalar_select %p149, %s150, %s151
      %p155 = pneg %p149
      %p156 = scmp.eq.s32.totalorder %s18, 15
      %p157 = por %p155, %p156
      %p158 = scmp.ne.s32.totalorder %s150, %s153
      %p159 = scmp.eq.s32.totalorder %s18, 0
      %p160 = por %p158, %p159
      %p161 = scmp.ne.s32.totalorder %s150, %s153
      %p162 = scmp.eq.s32.totalorder %s23, 15
      %p163 = por %p161, %p162
      %p164 = scmp.ne.s32.totalorder %s153, %s154
      %p165 = scmp.eq.s32.totalorder %s23, 0
      %p166 = por %p164, %p165
      %p167 = scmp.ne.s32.totalorder %s153, %s154
      %p168 = scmp.eq.s32.totalorder %s24, 15
      %p169 = por %p167, %p168
      %p171 = scmp.ne.s32.totalorder %s154, %s170
      %p172 = scmp.eq.s32.totalorder %s24, 0
      %p173 = por %p171, %p172
      %p174 = scmp.le.s32.totalorder 1, %s18
      %p175 = scmp.lt.s32.totalorder %s18, 17
      %p176 = pnand %p174, %p175
      %p177 = pneg %p176
      // Predicated region
      $region9: #{tpu_custom_call.1} parent=5 // pred_check
        _
      $region10: #{tpu_custom_call.1} parent=5 // pred_check_branch
        %179 = sbr.rel (%p176) target = $region12
      $region11: #{tpu_custom_call.1} parent=5 // pred_region
        %s180 = ssub.s32 %s18, 1
        // Predicated region
        $region13: #{tpu_custom_call.1} parent=11 // pred_check
          %p181 = pneg %p77
        $region14: #{tpu_custom_call.1} parent=11 // pred_check_branch
          %183 = sbr.rel (%p181) target = $region16
        $region15: #{tpu_custom_call.1} parent=11 // pred_region
          _
        $region16: #{tpu_custom_call.1} parent=11 // pred_fallthru
          _
        // Predicated region
        $region17: #{tpu_custom_call.1} parent=11 // pred_check
          %p184 = pneg %p98
        $region18: #{tpu_custom_call.1} parent=11 // pred_check_branch
          %186 = sbr.rel (%p184) target = $region20
        $region19: #{tpu_custom_call.1} parent=11 // pred_region
          %s188 = ssub.s32 6144, 6144
          %189 = vsyncadd [#allocation8], %s188
          %s190 = sshll.u32 [#allocation7], 4
          %s191 = int_to_ptr.vmem [resolvable:$true] %s190
          %196 = dma.hbm_to_vmem [thread:$0]  %s2, 6144, %s191, [#allocation8], 128, 128, 8
        $region20: #{tpu_custom_call.1} parent=11 // pred_fallthru
          _
        // Predicated region
        $region21: #{tpu_custom_call.1} parent=11 // pred_check
          %p197 = pneg %p119
        $region22: #{tpu_custom_call.1} parent=11 // pred_check_branch
          %199 = sbr.rel (%p197) target = $region24
        $region23: #{tpu_custom_call.1} parent=11 // pred_region
          %s201 = ssub.s32 2048, 2048
          %202 = vsyncadd [#allocation8], %s201
          %s203 = sshll.u32 [#allocation9], 4
          %s204 = int_to_ptr.vmem [resolvable:$true] %s203
          %209 = dma.hbm_to_vmem [thread:$0]  %s3, 2048, %s204, [#allocation8], 128, 128, 8
        $region24: #{tpu_custom_call.1} parent=11 // pred_fallthru
          _
        // Predicated region
        $region25: #{tpu_custom_call.1} parent=11 // pred_check
          %p210 = pneg %p140
        $region26: #{tpu_custom_call.1} parent=11 // pred_check_branch
          %212 = sbr.rel (%p210) target = $region28
        $region27: #{tpu_custom_call.1} parent=11 // pred_region
          _
        $region28: #{tpu_custom_call.1} parent=11 // pred_fallthru
          _
      $region12: #{tpu_custom_call.1} parent=5 // pred_fallthru
        _
      %p213 = scmp.lt.s32.totalorder %s18, 16
      // Predicated region
      $region29: #{tpu_custom_call.1} parent=5 // pred_check
        %p214 = pneg %p213
      $region30: #{tpu_custom_call.1} parent=5 // pred_check_branch
        %216 = sbr.rel (%p214) target = $region32
      $region31: #{tpu_custom_call.1} parent=5 // pred_region
        // Predicated region
        $region33: #{tpu_custom_call.1} parent=31 // pred_check
          %p217 = pneg %p50
        $region34: #{tpu_custom_call.1} parent=31 // pred_check_branch
          %219 = sbr.rel (%p217) target = $region36
        $region35: #{tpu_custom_call.1} parent=31 // pred_region
          %s220 = sand.u32 %s40, 1
          %s221 = scalar_lea.sflag [#allocation5], %s220
          %s222 = sand.u32 %s40, 1
          %s223 = smul.addr %s222, 128
          %s224 = scalar_lea.vmem [#allocation4], %s223
          %s226 = ssub.s32 2048, 2048
          %227 = vsyncadd %s221, %s226
          %s228 = smul.addr %s25, 16
          %s229 = smul.addr %s228, 128
          %s230 = scalar_lea.hbm %s0, %s229
          %s231 = sshll.u32 %s224, 4
          %s232 = int_to_ptr.vmem [resolvable:$true] %s231
          %237 = dma.hbm_to_vmem [thread:$0]  %s230, 2048, %s232, %s221, 128, 128, 8
        $region36: #{tpu_custom_call.1} parent=31 // pred_fallthru
          _
      $region32: #{tpu_custom_call.1} parent=5 // pred_fallthru
        _
      %p238 = scmp.le.s32.totalorder 1, %s18
      %p239 = scmp.lt.s32.totalorder %s18, 17
      %p240 = pnand %p238, %p239
      %p241 = pneg %p240
      // Predicated region
      $region37: #{tpu_custom_call.1} parent=5 // pred_check
        _
      $region38: #{tpu_custom_call.1} parent=5 // pred_check_branch
        %243 = sbr.rel (%p240) target = $region40
      $region39: #{tpu_custom_call.1} parent=5 // pred_region
        %s244 = ssub.s32 %s18, 1
        %s245 = sand.u32 %s43, 1
        %s246 = scalar_lea.sflag [#allocation5], %s245
        %s247 = sand.u32 %s43, 1
        %s248 = smul.addr %s247, 128
        %s249 = scalar_lea.vmem [#allocation4], %s248
        // Predicated region
        $region41: #{tpu_custom_call.1} parent=39 // pred_check
          %p250 = pneg %p56
        $region42: #{tpu_custom_call.1} parent=39 // pred_check_branch
          %252 = sbr.rel (%p250) target = $region44
        $region43: #{tpu_custom_call.1} parent=39 // pred_region
          %253 = dma.done %s246, 2048
        $region44: #{tpu_custom_call.1} parent=39 // pred_fallthru
          _
        // Predicated region
        $region45: #{tpu_custom_call.1} parent=39 // pred_check
          %p254 = pneg %p98
        $region46: #{tpu_custom_call.1} parent=39 // pred_check_branch
          %256 = sbr.rel (%p254) target = $region48
        $region47: #{tpu_custom_call.1} parent=39 // pred_region
          %257 = dma.done [#allocation8], 6144
        $region48: #{tpu_custom_call.1} parent=39 // pred_fallthru
          _
        // Predicated region
        $region49: #{tpu_custom_call.1} parent=39 // pred_check
          %p258 = pneg %p119
        $region50: #{tpu_custom_call.1} parent=39 // pred_check_branch
          %260 = sbr.rel (%p258) target = $region52
        $region51: #{tpu_custom_call.1} parent=39 // pred_region
          %261 = dma.done [#allocation8], 2048
        $region52: #{tpu_custom_call.1} parent=39 // pred_fallthru
          _
        %s262 = sand.u32 %s43, 1
        %s263 = scalar_lea.sflag [#allocation5], %s262
        %s264 = sand.u32 %s43, 1
        %s265 = smul.addr %s264, 128
        %s266 = scalar_lea.vmem [#allocation4], %s265
        %p267 = pneg %p56
        %p268 = pneg %p53
        %p269 = pneg %p77
        %p270 = pneg %p74
        %p271 = pneg %p98
        %p272 = pneg %p95
        %p273 = pneg %p119
        %p274 = pneg %p116
        %p275 = pneg %p140
        %p276 = pneg %p137
        %p277 = pneg %p166
        %p278 = pneg %p163
        %s279 = sand.u32 %s153, 1
        %s280 = scalar_lea.sflag [#allocation6], %s279
        %s281 = sand.u32 %s153, 1
        %s282 = smul.addr %s281, 128
        %s283 = scalar_lea.vmem [#allocation10], %s282
        %p284 = scmp.eq.s32.totalorder %s28, 0
        // Predicated region
        $region53: #{tpu_custom_call.1} parent=39 // pred_check
          %p285 = pneg %p284
        $region54: #{tpu_custom_call.1} parent=39 // pred_check_branch
          %287 = sbr.rel (%p285) target = $region56
        $region55: #{tpu_custom_call.1} parent=39 // pred_region
          %v288 = vld [vmem:[#allocation7] sm:$0xff]
          %v289 = vld [vmem:[#allocation7 + $0x8] sm:$0xff]
          %v290 = vld [vmem:[#allocation7 + $0x10] sm:$0xff]
          %v291 = vld [vmem:[#allocation7 + $0x18] sm:$0xff]
          %v292 = vld [vmem:[#allocation7 + $0x20] sm:$0xff]
          %v293 = vld [vmem:[#allocation7 + $0x28] sm:$0xff]
          %v294 = vld [vmem:[#allocation7 + $0x30] sm:$0xff]
          %v295 = vld [vmem:[#allocation7 + $0x38] sm:$0xff]
          %v296 = vld [vmem:[#allocation7 + $0x40] sm:$0xff]
          %v297 = vld [vmem:[#allocation7 + $0x48] sm:$0xff]
          %v298 = vld [vmem:[#allocation7 + $0x50] sm:$0xff]
          %v299 = vld [vmem:[#allocation7 + $0x58] sm:$0xff]
          %v300 = vld [vmem:[#allocation7 + $0x60] sm:$0xff]
          %v301 = vld [vmem:[#allocation7 + $0x68] sm:$0xff]
          %v302 = vld [vmem:[#allocation7 + $0x70] sm:$0xff]
          %v303 = vld [vmem:[#allocation7 + $0x78] sm:$0xff]
          %v304 = vld [vmem:[#allocation7 + $0x80] sm:$0xff]
          %v305 = vld [vmem:[#allocation7 + $0x88] sm:$0xff]
          %v306 = vld [vmem:[#allocation7 + $0x90] sm:$0xff]
          %v307 = vld [vmem:[#allocation7 + $0x98] sm:$0xff]
          %v308 = vld [vmem:[#allocation7 + $0xa0] sm:$0xff]
          %v309 = vld [vmem:[#allocation7 + $0xa8] sm:$0xff]
          %v310 = vld [vmem:[#allocation7 + $0xb0] sm:$0xff]
          %v311 = vld [vmem:[#allocation7 + $0xb8] sm:$0xff]
          %v312 = vld [vmem:[#allocation7 + $0xc0] sm:$0xff]
          %v313 = vld [vmem:[#allocation7 + $0xc8] sm:$0xff]
          %v314 = vld [vmem:[#allocation7 + $0xd0] sm:$0xff]
          %v315 = vld [vmem:[#allocation7 + $0xd8] sm:$0xff]
          %v316 = vld [vmem:[#allocation7 + $0xe0] sm:$0xff]
          %v317 = vld [vmem:[#allocation7 + $0xe8] sm:$0xff]
          %v318 = vld [vmem:[#allocation7 + $0xf0] sm:$0xff]
          %v319 = vld [vmem:[#allocation7 + $0xf8] sm:$0xff]
          %v320 = vld [vmem:[#allocation7 + $0x100] sm:$0xff]
          %v321 = vld [vmem:[#allocation7 + $0x108] sm:$0xff]
          %v322 = vld [vmem:[#allocation7 + $0x110] sm:$0xff]
          %v323 = vld [vmem:[#allocation7 + $0x118] sm:$0xff]
          %v324 = vld [vmem:[#allocation7 + $0x120] sm:$0xff]
          %v325 = vld [vmem:[#allocation7 + $0x128] sm:$0xff]
          %v326 = vld [vmem:[#allocation7 + $0x130] sm:$0xff]
          %v327 = vld [vmem:[#allocation7 + $0x138] sm:$0xff]
          %v328 = vld [vmem:[#allocation7 + $0x140] sm:$0xff]
          %v329 = vld [vmem:[#allocation7 + $0x148] sm:$0xff]
          %v330 = vld [vmem:[#allocation7 + $0x150] sm:$0xff]
          %v331 = vld [vmem:[#allocation7 + $0x158] sm:$0xff]
          %v332 = vld [vmem:[#allocation7 + $0x160] sm:$0xff]
          %v333 = vld [vmem:[#allocation7 + $0x168] sm:$0xff]
          %v334 = vld [vmem:[#allocation7 + $0x170] sm:$0xff]
          %v335 = vld [vmem:[#allocation7 + $0x178] sm:$0xff]
          %v336 = vld [vmem:[%s249] sm:$0xff]
          %v337 = vld [vmem:[%s249 + $0x8] sm:$0xff]
          %v338 = vld [vmem:[%s249 + $0x10] sm:$0xff]
          %v339 = vld [vmem:[%s249 + $0x18] sm:$0xff]
          %v340 = vld [vmem:[%s249 + $0x20] sm:$0xff]
          %v341 = vld [vmem:[%s249 + $0x28] sm:$0xff]
          %v342 = vld [vmem:[%s249 + $0x30] sm:$0xff]
          %v343 = vld [vmem:[%s249 + $0x38] sm:$0xff]
          %v344 = vld [vmem:[%s249 + $0x40] sm:$0xff]
          %v345 = vld [vmem:[%s249 + $0x48] sm:$0xff]
          %v346 = vld [vmem:[%s249 + $0x50] sm:$0xff]
          %v347 = vld [vmem:[%s249 + $0x58] sm:$0xff]
          %v348 = vld [vmem:[%s249 + $0x60] sm:$0xff]
          %v349 = vld [vmem:[%s249 + $0x68] sm:$0xff]
          %v350 = vld [vmem:[%s249 + $0x70] sm:$0xff]
          %v351 = vld [vmem:[%s249 + $0x78] sm:$0xff]
          %352 = vmatprep.subr.mxu0 0.0
          %353 = vmatpush1.msra.mxu0 %v336
          %354 = vmatprep.subr.mxu0 0.0
          %355 = vmatpush1.msra.mxu0 %v337
          %356 = vmatprep.subr.mxu0 0.0
          %357 = vmatpush1.msra.mxu0 %v338
          %358 = vmatprep.subr.mxu0 0.0
          %359 = vmatpush1.msra.mxu0 %v339
          %360 = vmatprep.subr.mxu0 0.0
          %361 = vmatpush1.msra.mxu0 %v340
          %362 = vmatprep.subr.mxu0 0.0
          %363 = vmatpush1.msra.mxu0 %v341
          %364 = vmatprep.subr.mxu0 0.0
          %365 = vmatpush1.msra.mxu0 %v342
          %366 = vmatprep.subr.mxu0 0.0
          %367 = vmatpush1.msra.mxu0 %v343
          %368 = vmatprep.subr.mxu0 0.0
          %369 = vmatpush1.msra.mxu0 %v344
          %370 = vmatprep.subr.mxu0 0.0
          %371 = vmatpush1.msra.mxu0 %v345
          %372 = vmatprep.subr.mxu0 0.0
          %373 = vmatpush1.msra.mxu0 %v346
          %374 = vmatprep.subr.mxu0 0.0
          %375 = vmatpush1.msra.mxu0 %v347
          %376 = vmatprep.subr.mxu0 0.0
          %377 = vmatpush1.msra.mxu0 %v348
          %378 = vmatprep.subr.mxu0 0.0
          %379 = vmatpush1.msra.mxu0 %v349
          %380 = vmatprep.subr.mxu0 0.0
          %381 = vmatpush1.msra.mxu0 %v350
          %382 = vmatprep.subr.mxu0 0.0
          %383 = vmatpush1.msra.mxu0 %v351
          %384 = vmatprep.subr.mxu0 0.0
          %385 = vmatpush1.msra.mxu0 0.0
          %386 = vmatprep.subr.mxu0 0.0
          %387 = vmatpush1.msra.mxu0 0.0
          %388 = vmatprep.subr.mxu0 0.0
          %389 = vmatpush1.msra.mxu0 0.0
          %390 = vmatprep.subr.mxu0 0.0
          %391 = vmatpush1.msra.mxu0 0.0
          %392 = vmatprep.subr.mxu0 0.0
          %393 = vmatpush1.msra.mxu0 0.0
          %394 = vmatprep.subr.mxu0 0.0
          %395 = vmatpush1.msra.mxu0 0.0
          %396 = vmatprep.subr.mxu0 0.0
          %397 = vmatpush1.msra.mxu0 0.0
          %398 = vmatprep.subr.mxu0 0.0
          %399 = vmatpush1.msra.mxu0 0.0
          %400 = vmatprep.subr.mxu0 0.0
          %401 = vmatpush1.msra.mxu0 0.0
          %402 = vmatprep.subr.mxu0 0.0
          %403 = vmatpush1.msra.mxu0 0.0
          %404 = vmatprep.subr.mxu0 0.0
          %405 = vmatpush1.msra.mxu0 0.0
          %406 = vmatprep.subr.mxu0 0.0
          %407 = vmatpush1.msra.mxu0 0.0
          %408 = vmatprep.subr.mxu0 0.0
          %409 = vmatpush1.msra.mxu0 0.0
          %410 = vmatprep.subr.mxu0 0.0
          %411 = vmatpush1.msra.mxu0 0.0
          %412 = vmatprep.subr.mxu0 0.0
          %413 = vmatpush1.msra.mxu0 0.0
          %414 = vmatprep.subr.mxu0 0.0
          %415 = vmatpush1.msra.mxu0 0.0
          %416 = vmatprep.mubr.f32.mxu0 0.0
          %417 = vmatmul.mubr.f32.gmra.mrb[0].mxu0 %v288
          %v418 = vpop.f32.mrb[0].mxu0
          %v419 = vadd.f32 0.0, %v418
          %v420 = vpop.f32.mrb[0].mxu0
          %421 = vmatprep.mubr.f32.mxu0 0.0
          %422 = vmatmul.mubr.f32.gmra.mrb[0].mxu0 %v289
          %v423 = vpop.f32.mrb[0].mxu0
          %v424 = vadd.f32 0.0, %v423
          %v425 = vpop.f32.mrb[0].mxu0
          %426 = vmatprep.mubr.f32.mxu0 0.0
          %427 = vmatmul.mubr.f32.gmra.mrb[0].mxu0 %v290
          %v428 = vpop.f32.mrb[0].mxu0
          %v429 = vadd.f32 0.0, %v428
          %v430 = vpop.f32.mrb[0].mxu0
          %431 = vmatprep.mubr.f32.mxu0 0.0
          %432 = vmatmul.mubr.f32.gmra.mrb[0].mxu0 %v291
          %v433 = vpop.f32.mrb[0].mxu0
          %v434 = vadd.f32 0.0, %v433
          %v435 = vpop.f32.mrb[0].mxu0
          %436 = vmatprep.mubr.f32.mxu0 0.0
          %437 = vmatmul.mubr.f32.gmra.mrb[0].mxu0 %v292
          %v438 = vpop.f32.mrb[0].mxu0
          %v439 = vadd.f32 0.0, %v438
          %v440 = vpop.f32.mrb[0].mxu0
          %441 = vmatprep.mubr.f32.mxu0 0.0
          %442 = vmatmul.mubr.f32.gmra.mrb[0].mxu0 %v293
          %v443 = vpop.f32.mrb[0].mxu0
          %v444 = vadd.f32 0.0, %v443
          %v445 = vpop.f32.mrb[0].mxu0
          %446 = vmatprep.mubr.f32.mxu0 0.0
          %447 = vmatmul.mubr.f32.gmra.mrb[0].mxu0 %v294
          %v448 = vpop.f32.mrb[0].mxu0
          %v449 = vadd.f32 0.0, %v448
          %v450 = vpop.f32.mrb[0].mxu0
          %451 = vmatprep.mubr.f32.mxu0 0.0
          %452 = vmatmul.mubr.f32.gmra.mrb[0].mxu0 %v295
          %v453 = vpop.f32.mrb[0].mxu0
          %v454 = vadd.f32 0.0, %v453
          %v455 = vpop.f32.mrb[0].mxu0
          %456 = vmatprep.mubr.f32.mxu0 0.0
          %457 = vmatmul.mubr.f32.gmra.mrb[0].mxu0 %v296
          %v458 = vpop.f32.mrb[0].mxu0
          %v459 = vadd.f32 0.0, %v458
          %v460 = vpop.f32.mrb[0].mxu0
          %461 = vmatprep.mubr.f32.mxu0 0.0
          %462 = vmatmul.mubr.f32.gmra.mrb[0].mxu0 %v297
          %v463 = vpop.f32.mrb[0].mxu0
          %v464 = vadd.f32 0.0, %v463
          %v465 = vpop.f32.mrb[0].mxu0
          %466 = vmatprep.mubr.f32.mxu0 0.0
          %467 = vmatmul.mubr.f32.gmra.mrb[0].mxu0 %v298
          %v468 = vpop.f32.mrb[0].mxu0
          %v469 = vadd.f32 0.0, %v468
          %v470 = vpop.f32.mrb[0].mxu0
          %471 = vmatprep.mubr.f32.mxu0 0.0
          %472 = vmatmul.mubr.f32.gmra.mrb[0].mxu0 %v299
          %v473 = vpop.f32.mrb[0].mxu0
          %v474 = vadd.f32 0.0, %v473
          %v475 = vpop.f32.mrb[0].mxu0
          %476 = vmatprep.mubr.f32.mxu0 0.0
          %477 = vmatmul.mubr.f32.gmra.mrb[0].mxu0 %v300
          %v478 = vpop.f32.mrb[0].mxu0
          %v479 = vadd.f32 0.0, %v478
          %v480 = vpop.f32.mrb[0].mxu0
          %481 = vmatprep.mubr.f32.mxu0 0.0
          %482 = vmatmul.mubr.f32.gmra.mrb[0].mxu0 %v301
          %v483 = vpop.f32.mrb[0].mxu0
          %v484 = vadd.f32 0.0, %v483
          %v485 = vpop.f32.mrb[0].mxu0
          %486 = vmatprep.mubr.f32.mxu0 0.0
          %487 = vmatmul.mubr.f32.gmra.mrb[0].mxu0 %v302
          %v488 = vpop.f32.mrb[0].mxu0
          %v489 = vadd.f32 0.0, %v488
          %v490 = vpop.f32.mrb[0].mxu0
          %491 = vmatprep.mubr.f32.mxu0 0.0
          %492 = vmatmul.mubr.f32.gmra.mrb[0].mxu0 %v303
          %v493 = vpop.f32.mrb[0].mxu0
          %v494 = vadd.f32 0.0, %v493
          %v495 = vpop.f32.mrb[0].mxu0
          %496 = vmatprep.mubr.f32.mxu0 0.0
          %497 = vmatmul.mubr.f32.gmra.mrb[0].mxu0 %v304
          %v498 = vpop.f32.mrb[0].mxu0
          %v499 = vadd.f32 0.0, %v498
          %v500 = vpop.f32.mrb[0].mxu0
          %501 = vmatprep.mubr.f32.mxu0 0.0
          %502 = vmatmul.mubr.f32.gmra.mrb[0].mxu0 %v305
          %v503 = vpop.f32.mrb[0].mxu0
          %v504 = vadd.f32 0.0, %v503
          %v505 = vpop.f32.mrb[0].mxu0
          %506 = vmatprep.mubr.f32.mxu0 0.0
          %507 = vmatmul.mubr.f32.gmra.mrb[0].mxu0 %v306
          %v508 = vpop.f32.mrb[0].mxu0
          %v509 = vadd.f32 0.0, %v508
          %v510 = vpop.f32.mrb[0].mxu0
          %511 = vmatprep.mubr.f32.mxu0 0.0
          %512 = vmatmul.mubr.f32.gmra.mrb[0].mxu0 %v307
          %v513 = vpop.f32.mrb[0].mxu0
          %v514 = vadd.f32 0.0, %v513
          %v515 = vpop.f32.mrb[0].mxu0
          %516 = vmatprep.mubr.f32.mxu0 0.0
          %517 = vmatmul.mubr.f32.gmra.mrb[0].mxu0 %v308
          %v518 = vpop.f32.mrb[0].mxu0
          %v519 = vadd.f32 0.0, %v518
          %v520 = vpop.f32.mrb[0].mxu0
          %521 = vmatprep.mubr.f32.mxu0 0.0
          %522 = vmatmul.mubr.f32.gmra.mrb[0].mxu0 %v309
          %v523 = vpop.f32.mrb[0].mxu0
          %v524 = vadd.f32 0.0, %v523
          %v525 = vpop.f32.mrb[0].mxu0
          %526 = vmatprep.mubr.f32.mxu0 0.0
          %527 = vmatmul.mubr.f32.gmra.mrb[0].mxu0 %v310
          %v528 = vpop.f32.mrb[0].mxu0
          %v529 = vadd.f32 0.0, %v528
          %v530 = vpop.f32.mrb[0].mxu0
          %531 = vmatprep.mubr.f32.mxu0 0.0
          %532 = vmatmul.mubr.f32.gmra.mrb[0].mxu0 %v311
          %v533 = vpop.f32.mrb[0].mxu0
          %v534 = vadd.f32 0.0, %v533
          %v535 = vpop.f32.mrb[0].mxu0
          %536 = vmatprep.mubr.f32.mxu0 0.0
          %537 = vmatmul.mubr.f32.gmra.mrb[0].mxu0 %v312
          %v538 = vpop.f32.mrb[0].mxu0
          %v539 = vadd.f32 0.0, %v538
          %v540 = vpop.f32.mrb[0].mxu0
          %541 = vmatprep.mubr.f32.mxu0 0.0
          %542 = vmatmul.mubr.f32.gmra.mrb[0].mxu0 %v313
          %v543 = vpop.f32.mrb[0].mxu0
          %v544 = vadd.f32 0.0, %v543
          %v545 = vpop.f32.mrb[0].mxu0
          %546 = vmatprep.mubr.f32.mxu0 0.0
          %547 = vmatmul.mubr.f32.gmra.mrb[0].mxu0 %v314
          %v548 = vpop.f32.mrb[0].mxu0
          %v549 = vadd.f32 0.0, %v548
          %v550 = vpop.f32.mrb[0].mxu0
          %551 = vmatprep.mubr.f32.mxu0 0.0
          %552 = vmatmul.mubr.f32.gmra.mrb[0].mxu0 %v315
          %v553 = vpop.f32.mrb[0].mxu0
          %v554 = vadd.f32 0.0, %v553
          %v555 = vpop.f32.mrb[0].mxu0
          %556 = vmatprep.mubr.f32.mxu0 0.0
          %557 = vmatmul.mubr.f32.gmra.mrb[0].mxu0 %v316
          %v558 = vpop.f32.mrb[0].mxu0
          %v559 = vadd.f32 0.0, %v558
          %v560 = vpop.f32.mrb[0].mxu0
          %561 = vmatprep.mubr.f32.mxu0 0.0
          %562 = vmatmul.mubr.f32.gmra.mrb[0].mxu0 %v317
          %v563 = vpop.f32.mrb[0].mxu0
          %v564 = vadd.f32 0.0, %v563
          %v565 = vpop.f32.mrb[0].mxu0
          %566 = vmatprep.mubr.f32.mxu0 0.0
          %567 = vmatmul.mubr.f32.gmra.mrb[0].mxu0 %v318
          %v568 = vpop.f32.mrb[0].mxu0
          %v569 = vadd.f32 0.0, %v568
          %v570 = vpop.f32.mrb[0].mxu0
          %571 = vmatprep.mubr.f32.mxu0 0.0
          %572 = vmatmul.mubr.f32.gmra.mrb[0].mxu0 %v319
          %v573 = vpop.f32.mrb[0].mxu0
          %v574 = vadd.f32 0.0, %v573
          %v575 = vpop.f32.mrb[0].mxu0
          %576 = vmatprep.mubr.f32.mxu0 0.0
          %577 = vmatmul.mubr.f32.gmra.mrb[0].mxu0 %v320
          %v578 = vpop.f32.mrb[0].mxu0
          %v579 = vadd.f32 0.0, %v578
          %v580 = vpop.f32.mrb[0].mxu0
          %581 = vmatprep.mubr.f32.mxu0 0.0
          %582 = vmatmul.mubr.f32.gmra.mrb[0].mxu0 %v321
          %v583 = vpop.f32.mrb[0].mxu0
          %v584 = vadd.f32 0.0, %v583
          %v585 = vpop.f32.mrb[0].mxu0
          %586 = vmatprep.mubr.f32.mxu0 0.0
          %587 = vmatmul.mubr.f32.gmra.mrb[0].mxu0 %v322
          %v588 = vpop.f32.mrb[0].mxu0
          %v589 = vadd.f32 0.0, %v588
          %v590 = vpop.f32.mrb[0].mxu0
          %591 = vmatprep.mubr.f32.mxu0 0.0
          %592 = vmatmul.mubr.f32.gmra.mrb[0].mxu0 %v323
          %v593 = vpop.f32.mrb[0].mxu0
          %v594 = vadd.f32 0.0, %v593
          %v595 = vpop.f32.mrb[0].mxu0
          %596 = vmatprep.mubr.f32.mxu0 0.0
          %597 = vmatmul.mubr.f32.gmra.mrb[0].mxu0 %v324
          %v598 = vpop.f32.mrb[0].mxu0
          %v599 = vadd.f32 0.0, %v598
          %v600 = vpop.f32.mrb[0].mxu0
          %601 = vmatprep.mubr.f32.mxu0 0.0
          %602 = vmatmul.mubr.f32.gmra.mrb[0].mxu0 %v325
          %v603 = vpop.f32.mrb[0].mxu0
          %v604 = vadd.f32 0.0, %v603
          %v605 = vpop.f32.mrb[0].mxu0
          %606 = vmatprep.mubr.f32.mxu0 0.0
          %607 = vmatmul.mubr.f32.gmra.mrb[0].mxu0 %v326
          %v608 = vpop.f32.mrb[0].mxu0
          %v609 = vadd.f32 0.0, %v608
          %v610 = vpop.f32.mrb[0].mxu0
          %611 = vmatprep.mubr.f32.mxu0 0.0
          %612 = vmatmul.mubr.f32.gmra.mrb[0].mxu0 %v327
          %v613 = vpop.f32.mrb[0].mxu0
          %v614 = vadd.f32 0.0, %v613
          %v615 = vpop.f32.mrb[0].mxu0
          %616 = vmatprep.mubr.f32.mxu0 0.0
          %617 = vmatmul.mubr.f32.gmra.mrb[0].mxu0 %v328
          %v618 = vpop.f32.mrb[0].mxu0
          %v619 = vadd.f32 0.0, %v618
          %v620 = vpop.f32.mrb[0].mxu0
          %621 = vmatprep.mubr.f32.mxu0 0.0
          %622 = vmatmul.mubr.f32.gmra.mrb[0].mxu0 %v329
          %v623 = vpop.f32.mrb[0].mxu0
          %v624 = vadd.f32 0.0, %v623
          %v625 = vpop.f32.mrb[0].mxu0
          %626 = vmatprep.mubr.f32.mxu0 0.0
          %627 = vmatmul.mubr.f32.gmra.mrb[0].mxu0 %v330
          %v628 = vpop.f32.mrb[0].mxu0
          %v629 = vadd.f32 0.0, %v628
          %v630 = vpop.f32.mrb[0].mxu0
          %631 = vmatprep.mubr.f32.mxu0 0.0
          %632 = vmatmul.mubr.f32.gmra.mrb[0].mxu0 %v331
          %v633 = vpop.f32.mrb[0].mxu0
          %v634 = vadd.f32 0.0, %v633
          %v635 = vpop.f32.mrb[0].mxu0
          %636 = vmatprep.mubr.f32.mxu0 0.0
          %637 = vmatmul.mubr.f32.gmra.mrb[0].mxu0 %v332
          %v638 = vpop.f32.mrb[0].mxu0
          %v639 = vadd.f32 0.0, %v638
          %v640 = vpop.f32.mrb[0].mxu0
          %641 = vmatprep.mubr.f32.mxu0 0.0
          %642 = vmatmul.mubr.f32.gmra.mrb[0].mxu0 %v333
          %v643 = vpop.f32.mrb[0].mxu0
          %v644 = vadd.f32 0.0, %v643
          %v645 = vpop.f32.mrb[0].mxu0
          %646 = vmatprep.mubr.f32.mxu0 0.0
          %647 = vmatmul.mubr.f32.gmra.mrb[0].mxu0 %v334
          %v648 = vpop.f32.mrb[0].mxu0
          %v649 = vadd.f32 0.0, %v648
          %v650 = vpop.f32.mrb[0].mxu0
          %651 = vmatprep.mubr.f32.mxu0 0.0
          %652 = vmatmul.mubr.f32.gmra.mrb[0].mxu0 %v335
          %v653 = vpop.f32.mrb[0].mxu0
          %v654 = vadd.f32 0.0, %v653
          %v655 = vpop.f32.mrb[0].mxu0
          %656 = vdwg.mxu0
          %657 = vst [vmem:[#allocation2] sm:$0xff] %v419
          %658 = vst [vmem:[#allocation2 + $0x8] sm:$0xff] %v424
          %659 = vst [vmem:[#allocation2 + $0x10] sm:$0xff] %v429
          %660 = vst [vmem:[#allocation2 + $0x18] sm:$0xff] %v434
          %661 = vst [vmem:[#allocation2 + $0x20] sm:$0xff] %v439
          %662 = vst [vmem:[#allocation2 + $0x28] sm:$0xff] %v444
          %663 = vst [vmem:[#allocation2 + $0x30] sm:$0xff] %v449
          %664 = vst [vmem:[#allocation2 + $0x38] sm:$0xff] %v454
          %665 = vst [vmem:[#allocation2 + $0x40] sm:$0xff] %v459
          %666 = vst [vmem:[#allocation2 + $0x48] sm:$0xff] %v464
          %667 = vst [vmem:[#allocation2 + $0x50] sm:$0xff] %v469
          %668 = vst [vmem:[#allocation2 + $0x58] sm:$0xff] %v474
          %669 = vst [vmem:[#allocation2 + $0x60] sm:$0xff] %v479
          %670 = vst [vmem:[#allocation2 + $0x68] sm:$0xff] %v484
          %671 = vst [vmem:[#allocation2 + $0x70] sm:$0xff] %v489
          %672 = vst [vmem:[#allocation2 + $0x78] sm:$0xff] %v494
          %673 = vst [vmem:[#allocation2 + $0x80] sm:$0xff] %v499
          %674 = vst [vmem:[#allocation2 + $0x88] sm:$0xff] %v504
          %675 = vst [vmem:[#allocation2 + $0x90] sm:$0xff] %v509
          %676 = vst [vmem:[#allocation2 + $0x98] sm:$0xff] %v514
          %677 = vst [vmem:[#allocation2 + $0xa0] sm:$0xff] %v519
          %678 = vst [vmem:[#allocation2 + $0xa8] sm:$0xff] %v524
          %679 = vst [vmem:[#allocation2 + $0xb0] sm:$0xff] %v529
          %680 = vst [vmem:[#allocation2 + $0xb8] sm:$0xff] %v534
          %681 = vst [vmem:[#allocation2 + $0xc0] sm:$0xff] %v539
          %682 = vst [vmem:[#allocation2 + $0xc8] sm:$0xff] %v544
          %683 = vst [vmem:[#allocation2 + $0xd0] sm:$0xff] %v549
          %684 = vst [vmem:[#allocation2 + $0xd8] sm:$0xff] %v554
          %685 = vst [vmem:[#allocation2 + $0xe0] sm:$0xff] %v559
          %686 = vst [vmem:[#allocation2 + $0xe8] sm:$0xff] %v564
          %687 = vst [vmem:[#allocation2 + $0xf0] sm:$0xff] %v569
          %688 = vst [vmem:[#allocation2 + $0xf8] sm:$0xff] %v574
          %689 = vst [vmem:[#allocation2 + $0x100] sm:$0xff] %v579
          %690 = vst [vmem:[#allocation2 + $0x108] sm:$0xff] %v584
          %691 = vst [vmem:[#allocation2 + $0x110] sm:$0xff] %v589
          %692 = vst [vmem:[#allocation2 + $0x118] sm:$0xff] %v594
          %693 = vst [vmem:[#allocation2 + $0x120] sm:$0xff] %v599
          %694 = vst [vmem:[#allocation2 + $0x128] sm:$0xff] %v604
          %695 = vst [vmem:[#allocation2 + $0x130] sm:$0xff] %v609
          %696 = vst [vmem:[#allocation2 + $0x138] sm:$0xff] %v614
          %697 = vst [vmem:[#allocation2 + $0x140] sm:$0xff] %v619
          %698 = vst [vmem:[#allocation2 + $0x148] sm:$0xff] %v624
          %699 = vst [vmem:[#allocation2 + $0x150] sm:$0xff] %v629
          %700 = vst [vmem:[#allocation2 + $0x158] sm:$0xff] %v634
          %701 = vst [vmem:[#allocation2 + $0x160] sm:$0xff] %v639
          %702 = vst [vmem:[#allocation2 + $0x168] sm:$0xff] %v644
          %703 = vst [vmem:[#allocation2 + $0x170] sm:$0xff] %v649
          %704 = vst [vmem:[#allocation2 + $0x178] sm:$0xff] %v654
        $region56: #{tpu_custom_call.1} parent=39 // pred_fallthru
          _
        %s705 = smul.u32 %s28, 16
        %s706 = sadd.s32 %s705, 128
        %s707 = sadd.s32 %s705, 256
        %s708 = scalar_lea.vmem [#allocation2], %s705
        %v709 = vld [vmem:[%s708] sm:$0xff]
        %v710 = vld [vmem:[%s708 + $0x8] sm:$0xff]
        %s711 = scalar_lea.vmem [#allocation2], %s706
        %v712 = vld [vmem:[%s711] sm:$0xff]
        %v713 = vld [vmem:[%s711 + $0x8] sm:$0xff]
        %s714 = scalar_lea.vmem [#allocation2], %s707
        %v715 = vld [vmem:[%s714] sm:$0xff]
        %v716 = vld [vmem:[%s714 + $0x8] sm:$0xff]
        %717 = vxpose.xlu0.b32.start [1/16] %v709, 128
        %718 = vxpose.xlu0.b32.cont [2/16] %v710, 128
        %719 = vxpose.xlu0.b32.cont [3/16] 0.0, 128
        %720 = vxpose.xlu0.b32.cont [4/16] 0.0, 128
        %721 = vxpose.xlu0.b32.cont [5/16] 0.0, 128
        %722 = vxpose.xlu0.b32.cont [6/16] 0.0, 128
        %723 = vxpose.xlu0.b32.cont [7/16] 0.0, 128
        %724 = vxpose.xlu0.b32.cont [8/16] 0.0, 128
        %725 = vxpose.xlu0.b32.cont [9/16] 0.0, 128
        %726 = vxpose.xlu0.b32.cont [10/16] 0.0, 128
        %727 = vxpose.xlu0.b32.cont [11/16] 0.0, 128
        %728 = vxpose.xlu0.b32.cont [12/16] 0.0, 128
        %729 = vxpose.xlu0.b32.cont [13/16] 0.0, 128
        %730 = vxpose.xlu0.b32.cont [14/16] 0.0, 128
        %731 = vxpose.xlu0.b32.cont [15/16] 0.0, 128
        %732 = vxpose.xlu0.b32.end [16/16] 0.0, 128
        %v733 = vpop.trf.xlu0
        %v734 = vpop.trf.xlu0
        %v735 = vpop.trf.xlu0
        %v736 = vpop.trf.xlu0
        %v737 = vpop.trf.xlu0
        %v738 = vpop.trf.xlu0
        %v739 = vpop.trf.xlu0
        %v740 = vpop.trf.xlu0
        %v741 = vpop.trf.xlu0
        %v742 = vpop.trf.xlu0
        %v743 = vpop.trf.xlu0
        %v744 = vpop.trf.xlu0
        %v745 = vpop.trf.xlu0
        %v746 = vpop.trf.xlu0
        %v747 = vpop.trf.xlu0
        %v748 = vpop.trf.xlu0
        %vm749 = vcmask 130048
        %v751 = vsel %vm749, %v733, 0
        %v754 = vsel %vm749, %v734, 0
        %v757 = vsel %vm749, %v735, 0
        %v760 = vsel %vm749, %v736, 0
        %v763 = vsel %vm749, %v737, 0
        %v766 = vsel %vm749, %v738, 0
        %v769 = vsel %vm749, %v739, 0
        %v772 = vsel %vm749, %v740, 0
        %v775 = vsel %vm749, %v741, 0
        %v778 = vsel %vm749, %v742, 0
        %v781 = vsel %vm749, %v743, 0
        %v784 = vsel %vm749, %v744, 0
        %v787 = vsel %vm749, %v745, 0
        %v790 = vsel %vm749, %v746, 0
        %v793 = vsel %vm749, %v747, 0
        %v796 = vsel %vm749, %v748, 0
        %798 = vmatprep.subr.mxu0 0.0
        %799 = vmatpush1.msra.mxu0 %v712
        %800 = vmatprep.subr.mxu0 0.0
        %801 = vmatpush1.msra.mxu0 %v713
        %802 = vmatprep.subr.mxu0 0.0
        %803 = vmatpush1.msra.mxu0 0.0
        %804 = vmatprep.subr.mxu0 0.0
        %805 = vmatpush1.msra.mxu0 0.0
        %806 = vmatprep.subr.mxu0 0.0
        %807 = vmatpush1.msra.mxu0 0.0
        %808 = vmatprep.subr.mxu0 0.0
        %809 = vmatpush1.msra.mxu0 0.0
        %810 = vmatprep.subr.mxu0 0.0
        %811 = vmatpush1.msra.mxu0 0.0
        %812 = vmatprep.subr.mxu0 0.0
        %813 = vmatpush1.msra.mxu0 0.0
        %814 = vmatprep.subr.mxu0 0.0
        %815 = vmatpush1.msra.mxu0 0.0
        %816 = vmatprep.subr.mxu0 0.0
        %817 = vmatpush1.msra.mxu0 0.0
        %818 = vmatprep.subr.mxu0 0.0
        %819 = vmatpush1.msra.mxu0 0.0
        %820 = vmatprep.subr.mxu0 0.0
        %821 = vmatpush1.msra.mxu0 0.0
        %822 = vmatprep.subr.mxu0 0.0
        %823 = vmatpush1.msra.mxu0 0.0
        %824 = vmatprep.subr.mxu0 0.0
        %825 = vmatpush1.msra.mxu0 0.0
        %826 = vmatprep.subr.mxu0 0.0
        %827 = vmatpush1.msra.mxu0 0.0
        %828 = vmatprep.subr.mxu0 0.0
        %829 = vmatpush1.msra.mxu0 0.0
        %830 = vmatprep.subr.mxu0 0.0
        %831 = vmatpush1.msra.mxu0 0.0
        %832 = vmatprep.subr.mxu0 0.0
        %833 = vmatpush1.msra.mxu0 0.0
        %834 = vmatprep.subr.mxu0 0.0
        %835 = vmatpush1.msra.mxu0 0.0
        %836 = vmatprep.subr.mxu0 0.0
        %837 = vmatpush1.msra.mxu0 0.0
        %838 = vmatprep.subr.mxu0 0.0
        %839 = vmatpush1.msra.mxu0 0.0
        %840 = vmatprep.subr.mxu0 0.0
        %841 = vmatpush1.msra.mxu0 0.0
        %842 = vmatprep.subr.mxu0 0.0
        %843 = vmatpush1.msra.mxu0 0.0
        %844 = vmatprep.subr.mxu0 0.0
        %845 = vmatpush1.msra.mxu0 0.0
        %846 = vmatprep.subr.mxu0 0.0
        %847 = vmatpush1.msra.mxu0 0.0
        %848 = vmatprep.subr.mxu0 0.0
        %849 = vmatpush1.msra.mxu0 0.0
        %850 = vmatprep.subr.mxu0 0.0
        %851 = vmatpush1.msra.mxu0 0.0
        %852 = vmatprep.subr.mxu0 0.0
        %853 = vmatpush1.msra.mxu0 0.0
        %854 = vmatprep.subr.mxu0 0.0
        %855 = vmatpush1.msra.mxu0 0.0
        %856 = vmatprep.subr.mxu0 0.0
        %857 = vmatpush1.msra.mxu0 0.0
        %858 = vmatprep.subr.mxu0 0.0
        %859 = vmatpush1.msra.mxu0 0.0
        %860 = vmatprep.subr.mxu0 0.0
        %861 = vmatpush1.msra.mxu0 0.0
        %862 = vmatprep.mubr.f32.mxu0 0.0
        %863 = vmatmul.mubr.f32.gmra.mrb[0].mxu0 %v751
        %v864 = vpop.f32.mrb[0].mxu0
        %v865 = vadd.f32 0.0, %v864
        %v866 = vpop.f32.mrb[0].mxu0
        %867 = vmatprep.mubr.f32.mxu0 0.0
        %868 = vmatmul.mubr.f32.gmra.mrb[0].mxu0 %v754
        %v869 = vpop.f32.mrb[0].mxu0
        %v870 = vadd.f32 0.0, %v869
        %v871 = vpop.f32.mrb[0].mxu0
        %872 = vmatprep.mubr.f32.mxu0 0.0
        %873 = vmatmul.mubr.f32.gmra.mrb[0].mxu0 %v757
        %v874 = vpop.f32.mrb[0].mxu0
        %v875 = vadd.f32 0.0, %v874
        %v876 = vpop.f32.mrb[0].mxu0
        %877 = vmatprep.mubr.f32.mxu0 0.0
        %878 = vmatmul.mubr.f32.gmra.mrb[0].mxu0 %v760
        %v879 = vpop.f32.mrb[0].mxu0
        %v880 = vadd.f32 0.0, %v879
        %v881 = vpop.f32.mrb[0].mxu0
        %882 = vmatprep.mubr.f32.mxu0 0.0
        %883 = vmatmul.mubr.f32.gmra.mrb[0].mxu0 %v763
        %v884 = vpop.f32.mrb[0].mxu0
        %v885 = vadd.f32 0.0, %v884
        %v886 = vpop.f32.mrb[0].mxu0
        %887 = vmatprep.mubr.f32.mxu0 0.0
        %888 = vmatmul.mubr.f32.gmra.mrb[0].mxu0 %v766
        %v889 = vpop.f32.mrb[0].mxu0
        %v890 = vadd.f32 0.0, %v889
        %v891 = vpop.f32.mrb[0].mxu0
        %892 = vmatprep.mubr.f32.mxu0 0.0
        %893 = vmatmul.mubr.f32.gmra.mrb[0].mxu0 %v769
        %v894 = vpop.f32.mrb[0].mxu0
        %v895 = vadd.f32 0.0, %v894
        %v896 = vpop.f32.mrb[0].mxu0
        %897 = vmatprep.mubr.f32.mxu0 0.0
        %898 = vmatmul.mubr.f32.gmra.mrb[0].mxu0 %v772
        %v899 = vpop.f32.mrb[0].mxu0
        %v900 = vadd.f32 0.0, %v899
        %v901 = vpop.f32.mrb[0].mxu0
        %902 = vmatprep.mubr.f32.mxu0 0.0
        %903 = vmatmul.mubr.f32.gmra.mrb[0].mxu0 %v775
        %v904 = vpop.f32.mrb[0].mxu0
        %v905 = vadd.f32 0.0, %v904
        %v906 = vpop.f32.mrb[0].mxu0
        %907 = vmatprep.mubr.f32.mxu0 0.0
        %908 = vmatmul.mubr.f32.gmra.mrb[0].mxu0 %v778
        %v909 = vpop.f32.mrb[0].mxu0
        %v910 = vadd.f32 0.0, %v909
        %v911 = vpop.f32.mrb[0].mxu0
        %912 = vmatprep.mubr.f32.mxu0 0.0
        %913 = vmatmul.mubr.f32.gmra.mrb[0].mxu0 %v781
        %v914 = vpop.f32.mrb[0].mxu0
        %v915 = vadd.f32 0.0, %v914
        %v916 = vpop.f32.mrb[0].mxu0
        %917 = vmatprep.mubr.f32.mxu0 0.0
        %918 = vmatmul.mubr.f32.gmra.mrb[0].mxu0 %v784
        %v919 = vpop.f32.mrb[0].mxu0
        %v920 = vadd.f32 0.0, %v919
        %v921 = vpop.f32.mrb[0].mxu0
        %922 = vmatprep.mubr.f32.mxu0 0.0
        %923 = vmatmul.mubr.f32.gmra.mrb[0].mxu0 %v787
        %v924 = vpop.f32.mrb[0].mxu0
        %v925 = vadd.f32 0.0, %v924
        %v926 = vpop.f32.mrb[0].mxu0
        %927 = vmatprep.mubr.f32.mxu0 0.0
        %928 = vmatmul.mubr.f32.gmra.mrb[0].mxu0 %v790
        %v929 = vpop.f32.mrb[0].mxu0
        %v930 = vadd.f32 0.0, %v929
        %v931 = vpop.f32.mrb[0].mxu0
        %932 = vmatprep.mubr.f32.mxu0 0.0
        %933 = vmatmul.mubr.f32.gmra.mrb[0].mxu0 %v793
        %v934 = vpop.f32.mrb[0].mxu0
        %v935 = vadd.f32 0.0, %v934
        %v936 = vpop.f32.mrb[0].mxu0
        %937 = vmatprep.mubr.f32.mxu0 0.0
        %938 = vmatmul.mubr.f32.gmra.mrb[0].mxu0 %v796
        %v939 = vpop.f32.mrb[0].mxu0
        %v940 = vadd.f32 0.0, %v939
        %v941 = vpop.f32.mrb[0].mxu0
        %942 = vdwg.mxu0
        %v943 = vld [vmem:[%s1] sm:$0xff]
        %v944 = vld [vmem:[%s1 + $0x8] sm:$0xff]
        %v945 = vld [vmem:[%s1 + $0x10] sm:$0xff]
        %v946 = vld [vmem:[%s1 + $0x18] sm:$0xff]
        %v947 = vld [vmem:[%s1 + $0x20] sm:$0xff]
        %v948 = vld [vmem:[%s1 + $0x28] sm:$0xff]
        %v949 = vld [vmem:[%s1 + $0x30] sm:$0xff]
        %v950 = vld [vmem:[%s1 + $0x38] sm:$0xff]
        %v951 = vld [vmem:[%s1 + $0x40] sm:$0xff]
        %v952 = vld [vmem:[%s1 + $0x48] sm:$0xff]
        %v953 = vld [vmem:[%s1 + $0x50] sm:$0xff]
        %v954 = vld [vmem:[%s1 + $0x58] sm:$0xff]
        %v955 = vld [vmem:[%s1 + $0x60] sm:$0xff]
        %v956 = vld [vmem:[%s1 + $0x68] sm:$0xff]
        %v957 = vld [vmem:[%s1 + $0x70] sm:$0xff]
        %v958 = vld [vmem:[%s1 + $0x78] sm:$0xff]
        %vm959 = vcmp.ne.f32.partialorder %v943, 0.0
        %vm960 = vcmp.ne.f32.partialorder %v944, 0.0
        %vm961 = vcmp.ne.f32.partialorder %v945, 0.0
        %vm962 = vcmp.ne.f32.partialorder %v946, 0.0
        %vm963 = vcmp.ne.f32.partialorder %v947, 0.0
        %vm964 = vcmp.ne.f32.partialorder %v948, 0.0
        %vm965 = vcmp.ne.f32.partialorder %v949, 0.0
        %vm966 = vcmp.ne.f32.partialorder %v950, 0.0
        %vm967 = vcmp.ne.f32.partialorder %v951, 0.0
        %vm968 = vcmp.ne.f32.partialorder %v952, 0.0
        %vm969 = vcmp.ne.f32.partialorder %v953, 0.0
        %vm970 = vcmp.ne.f32.partialorder %v954, 0.0
        %vm971 = vcmp.ne.f32.partialorder %v955, 0.0
        %vm972 = vcmp.ne.f32.partialorder %v956, 0.0
        %vm973 = vcmp.ne.f32.partialorder %v957, 0.0
        %vm974 = vcmp.ne.f32.partialorder %v958, 0.0
        %v975 = vsel %vm959, %v865, -1000.0
        %v976 = vsel %vm960, %v870, -1000.0
        %v977 = vsel %vm961, %v875, -1000.0
        %v978 = vsel %vm962, %v880, -1000.0
        %v979 = vsel %vm963, %v885, -1000.0
        %v980 = vsel %vm964, %v890, -1000.0
        %v981 = vsel %vm965, %v895, -1000.0
        %v982 = vsel %vm966, %v900, -1000.0
        %v983 = vsel %vm967, %v905, -1000.0
        %v984 = vsel %vm968, %v910, -1000.0
        %v985 = vsel %vm969, %v915, -1000.0
        %v986 = vsel %vm970, %v920, -1000.0
        %v987 = vsel %vm971, %v925, -1000.0
        %v988 = vsel %vm972, %v930, -1000.0
        %v989 = vsel %vm973, %v935, -1000.0
        %v990 = vsel %vm974, %v940, -1000.0
        %991 = vmax.xlane.f32.xlu0 %v975
        %v992 = vpop.xlane.xlu0 %991
        %993 = vmax.xlane.f32.xlu0 %v976
        %v994 = vpop.xlane.xlu0 %993
        %995 = vmax.xlane.f32.xlu0 %v977
        %v996 = vpop.xlane.xlu0 %995
        %997 = vmax.xlane.f32.xlu0 %v978
        %v998 = vpop.xlane.xlu0 %997
        %999 = vmax.xlane.f32.xlu0 %v979
        %v1000 = vpop.xlane.xlu0 %999
        %1001 = vmax.xlane.f32.xlu0 %v980
        %v1002 = vpop.xlane.xlu0 %1001
        %1003 = vmax.xlane.f32.xlu0 %v981
        %v1004 = vpop.xlane.xlu0 %1003
        %1005 = vmax.xlane.f32.xlu0 %v982
        %v1006 = vpop.xlane.xlu0 %1005
        %1007 = vmax.xlane.f32.xlu0 %v983
        %v1008 = vpop.xlane.xlu0 %1007
        %1009 = vmax.xlane.f32.xlu0 %v984
        %v1010 = vpop.xlane.xlu0 %1009
        %1011 = vmax.xlane.f32.xlu0 %v985
        %v1012 = vpop.xlane.xlu0 %1011
        %1013 = vmax.xlane.f32.xlu0 %v986
        %v1014 = vpop.xlane.xlu0 %1013
        %1015 = vmax.xlane.f32.xlu0 %v987
        %v1016 = vpop.xlane.xlu0 %1015
        %1017 = vmax.xlane.f32.xlu0 %v988
        %v1018 = vpop.xlane.xlu0 %1017
        %1019 = vmax.xlane.f32.xlu0 %v989
        %v1020 = vpop.xlane.xlu0 %1019
        %1021 = vmax.xlane.f32.xlu0 %v990
        %v1022 = vpop.xlane.xlu0 %1021
        %v1023 = vsub.f32 %v975, %v992
        %v1024 = vsub.f32 %v976, %v994
        %v1025 = vsub.f32 %v977, %v996
        %v1026 = vsub.f32 %v978, %v998
        %v1027 = vsub.f32 %v979, %v1000
        %v1028 = vsub.f32 %v980, %v1002
        %v1029 = vsub.f32 %v981, %v1004
        %v1030 = vsub.f32 %v982, %v1006
        %v1031 = vsub.f32 %v983, %v1008
        %v1032 = vsub.f32 %v984, %v1010
        %v1033 = vsub.f32 %v985, %v1012
        %v1034 = vsub.f32 %v986, %v1014
        %v1035 = vsub.f32 %v987, %v1016
        %v1036 = vsub.f32 %v988, %v1018
        %v1037 = vsub.f32 %v989, %v1020
        %v1038 = vsub.f32 %v990, %v1022
        %v1039 = vmul.f32 %v1023, 1.442695
        %v1040 = vpow.pop %v1039
        %v1041 = vmul.f32 %v1024, 1.442695
        %v1042 = vpow.pop %v1041
        %v1043 = vmul.f32 %v1025, 1.442695
        %v1044 = vpow.pop %v1043
        %v1045 = vmul.f32 %v1026, 1.442695
        %v1046 = vpow.pop %v1045
        %v1047 = vmul.f32 %v1027, 1.442695
        %v1048 = vpow.pop %v1047
        %v1049 = vmul.f32 %v1028, 1.442695
        %v1050 = vpow.pop %v1049
        %v1051 = vmul.f32 %v1029, 1.442695
        %v1052 = vpow.pop %v1051
        %v1053 = vmul.f32 %v1030, 1.442695
        %v1054 = vpow.pop %v1053
        %v1055 = vmul.f32 %v1031, 1.442695
        %v1056 = vpow.pop %v1055
        %v1057 = vmul.f32 %v1032, 1.442695
        %v1058 = vpow.pop %v1057
        %v1059 = vmul.f32 %v1033, 1.442695
        %v1060 = vpow.pop %v1059
        %v1061 = vmul.f32 %v1034, 1.442695
        %v1062 = vpow.pop %v1061
        %v1063 = vmul.f32 %v1035, 1.442695
        %v1064 = vpow.pop %v1063
        %v1065 = vmul.f32 %v1036, 1.442695
        %v1066 = vpow.pop %v1065
        %v1067 = vmul.f32 %v1037, 1.442695
        %v1068 = vpow.pop %v1067
        %v1069 = vmul.f32 %v1038, 1.442695
        %v1070 = vpow.pop %v1069
        %1071 = vadd.xlane.f32.xlu0 %v1040
        %v1072 = vpop.xlane.xlu0 %1071
        %1073 = vadd.xlane.f32.xlu0 %v1042
        %v1074 = vpop.xlane.xlu0 %1073
        %1075 = vadd.xlane.f32.xlu0 %v1044
        %v1076 = vpop.xlane.xlu0 %1075
        %1077 = vadd.xlane.f32.xlu0 %v1046
        %v1078 = vpop.xlane.xlu0 %1077
        %1079 = vadd.xlane.f32.xlu0 %v1048
        %v1080 = vpop.xlane.xlu0 %1079
        %1081 = vadd.xlane.f32.xlu0 %v1050
        %v1082 = vpop.xlane.xlu0 %1081
        %1083 = vadd.xlane.f32.xlu0 %v1052
        %v1084 = vpop.xlane.xlu0 %1083
        %1085 = vadd.xlane.f32.xlu0 %v1054
        %v1086 = vpop.xlane.xlu0 %1085
        %1087 = vadd.xlane.f32.xlu0 %v1056
        %v1088 = vpop.xlane.xlu0 %1087
        %1089 = vadd.xlane.f32.xlu0 %v1058
        %v1090 = vpop.xlane.xlu0 %1089
        %1091 = vadd.xlane.f32.xlu0 %v1060
        %v1092 = vpop.xlane.xlu0 %1091
        %1093 = vadd.xlane.f32.xlu0 %v1062
        %v1094 = vpop.xlane.xlu0 %1093
        %1095 = vadd.xlane.f32.xlu0 %v1064
        %v1096 = vpop.xlane.xlu0 %1095
        %1097 = vadd.xlane.f32.xlu0 %v1066
        %v1098 = vpop.xlane.xlu0 %1097
        %1099 = vadd.xlane.f32.xlu0 %v1068
        %v1100 = vpop.xlane.xlu0 %1099
        %1101 = vadd.xlane.f32.xlu0 %v1070
        %v1102 = vpop.xlane.xlu0 %1101
        %v1103 = vrcp.pop %v1072
        %v1104 = vrcp.pop %v1074
        %v1105 = vrcp.pop %v1076
        %v1106 = vrcp.pop %v1078
        %v1107 = vrcp.pop %v1080
        %v1108 = vrcp.pop %v1082
        %v1109 = vrcp.pop %v1084
        %v1110 = vrcp.pop %v1086
        %v1111 = vrcp.pop %v1088
        %v1112 = vrcp.pop %v1090
        %v1113 = vrcp.pop %v1092
        %v1114 = vrcp.pop %v1094
        %v1115 = vrcp.pop %v1096
        %v1116 = vrcp.pop %v1098
        %v1117 = vrcp.pop %v1100
        %v1118 = vrcp.pop %v1102
        %v1119 = vmul.f32 %v1040, %v1103
        %v1120 = vmul.f32 %v1042, %v1104
        %v1121 = vmul.f32 %v1044, %v1105
        %v1122 = vmul.f32 %v1046, %v1106
        %v1123 = vmul.f32 %v1048, %v1107
        %v1124 = vmul.f32 %v1050, %v1108
        %v1125 = vmul.f32 %v1052, %v1109
        %v1126 = vmul.f32 %v1054, %v1110
        %v1127 = vmul.f32 %v1056, %v1111
        %v1128 = vmul.f32 %v1058, %v1112
        %v1129 = vmul.f32 %v1060, %v1113
        %v1130 = vmul.f32 %v1062, %v1114
        %v1131 = vmul.f32 %v1064, %v1115
        %v1132 = vmul.f32 %v1066, %v1116
        %v1133 = vmul.f32 %v1068, %v1117
        %v1134 = vmul.f32 %v1070, %v1118
        %v1135 = vmul.f32 %v1119, %v943
        %v1136 = vmul.f32 %v1120, %v944
        %v1137 = vmul.f32 %v1121, %v945
        %v1138 = vmul.f32 %v1122, %v946
        %v1139 = vmul.f32 %v1123, %v947
        %v1140 = vmul.f32 %v1124, %v948
        %v1141 = vmul.f32 %v1125, %v949
        %v1142 = vmul.f32 %v1126, %v950
        %v1143 = vmul.f32 %v1127, %v951
        %v1144 = vmul.f32 %v1128, %v952
        %v1145 = vmul.f32 %v1129, %v953
        %v1146 = vmul.f32 %v1130, %v954
        %v1147 = vmul.f32 %v1131, %v955
        %v1148 = vmul.f32 %v1132, %v956
        %v1149 = vmul.f32 %v1133, %v957
        %v1150 = vmul.f32 %v1134, %v958
        %1151 = vmatprep.subr.mxu0 0.0
        %1152 = vmatpush1.xpose.msra.mxu0 %v1135
        %1153 = vmatprep.subr.mxu0 0.0
        %1154 = vmatpush1.xpose.msra.mxu0 %v1136
        %1155 = vmatprep.subr.mxu0 0.0
        %1156 = vmatpush1.xpose.msra.mxu0 %v1137
        %1157 = vmatprep.subr.mxu0 0.0
        %1158 = vmatpush1.xpose.msra.mxu0 %v1138
        %1159 = vmatprep.subr.mxu0 0.0
        %1160 = vmatpush1.xpose.msra.mxu0 %v1139
        %1161 = vmatprep.subr.mxu0 0.0
        %1162 = vmatpush1.xpose.msra.mxu0 %v1140
        %1163 = vmatprep.subr.mxu0 0.0
        %1164 = vmatpush1.xpose.msra.mxu0 %v1141
        %1165 = vmatprep.subr.mxu0 0.0
        %1166 = vmatpush1.xpose.msra.mxu0 %v1142
        %1167 = vmatprep.subr.mxu0 0.0
        %1168 = vmatpush1.xpose.msra.mxu0 %v1143
        %1169 = vmatprep.subr.mxu0 0.0
        %1170 = vmatpush1.xpose.msra.mxu0 %v1144
        %1171 = vmatprep.subr.mxu0 0.0
        %1172 = vmatpush1.xpose.msra.mxu0 %v1145
        %1173 = vmatprep.subr.mxu0 0.0
        %1174 = vmatpush1.xpose.msra.mxu0 %v1146
        %1175 = vmatprep.subr.mxu0 0.0
        %1176 = vmatpush1.xpose.msra.mxu0 %v1147
        %1177 = vmatprep.subr.mxu0 0.0
        %1178 = vmatpush1.xpose.msra.mxu0 %v1148
        %1179 = vmatprep.subr.mxu0 0.0
        %1180 = vmatpush1.xpose.msra.mxu0 %v1149
        %1181 = vmatprep.subr.mxu0 0.0
        %1182 = vmatpush1.xpose.msra.mxu0 %v1150
        %1183 = vmatprep.subr.mxu0 0.0
        %1184 = vmatpush1.xpose.msra.mxu0 0.0
        %1185 = vmatprep.subr.mxu0 0.0
        %1186 = vmatpush1.xpose.msra.mxu0 0.0
        %1187 = vmatprep.subr.mxu0 0.0
        %1188 = vmatpush1.xpose.msra.mxu0 0.0
        %1189 = vmatprep.subr.mxu0 0.0
        %1190 = vmatpush1.xpose.msra.mxu0 0.0
        %1191 = vmatprep.subr.mxu0 0.0
        %1192 = vmatpush1.xpose.msra.mxu0 0.0
        %1193 = vmatprep.subr.mxu0 0.0
        %1194 = vmatpush1.xpose.msra.mxu0 0.0
        %1195 = vmatprep.subr.mxu0 0.0
        %1196 = vmatpush1.xpose.msra.mxu0 0.0
        %1197 = vmatprep.subr.mxu0 0.0
        %1198 = vmatpush1.xpose.msra.mxu0 0.0
        %1199 = vmatprep.subr.mxu0 0.0
        %1200 = vmatpush1.xpose.msra.mxu0 0.0
        %1201 = vmatprep.subr.mxu0 0.0
        %1202 = vmatpush1.xpose.msra.mxu0 0.0
        %1203 = vmatprep.subr.mxu0 0.0
        %1204 = vmatpush1.xpose.msra.mxu0 0.0
        %1205 = vmatprep.subr.mxu0 0.0
        %1206 = vmatpush1.xpose.msra.mxu0 0.0
        %1207 = vmatprep.subr.mxu0 0.0
        %1208 = vmatpush1.xpose.msra.mxu0 0.0
        %1209 = vmatprep.subr.mxu0 0.0
        %1210 = vmatpush1.xpose.msra.mxu0 0.0
        %1211 = vmatprep.subr.mxu0 0.0
        %1212 = vmatpush1.xpose.msra.mxu0 0.0
        %1213 = vmatprep.subr.mxu0 0.0
        %1214 = vmatpush1.xpose.msra.mxu0 0.0
        %1215 = vmatprep.mubr.f32.mxu0 0.0
        %1216 = vmatmul.mubr.f32.gmra.mrb[0].mxu0 %v715
        %v1217 = vpop.f32.mrb[0].mxu0
        %v1218 = vadd.f32 0.0, %v1217
        %v1219 = vpop.f32.mrb[0].mxu0
        %1220 = vmatprep.mubr.f32.mxu0 0.0
        %1221 = vmatmul.mubr.f32.gmra.mrb[0].mxu0 %v716
        %v1222 = vpop.f32.mrb[0].mxu0
        %v1223 = vadd.f32 0.0, %v1222
        %v1224 = vpop.f32.mrb[0].mxu0
        %1225 = vdwg.mxu0
        %s1226 = scalar_lea.vmem [#allocation3], %s705
        %1227 = vst [vmem:[%s1226] sm:$0xff] %v1218
        %1228 = vst [vmem:[%s1226 + $0x8] sm:$0xff] %v1223
        %p1229 = scmp.eq.s32.totalorder %s28, 7
        // Predicated region
        $region57: #{tpu_custom_call.1} parent=39 // pred_check
          %p1230 = pneg %p1229
        $region58: #{tpu_custom_call.1} parent=39 // pred_check_branch
          %1232 = sbr.rel (%p1230) target = $region60
        $region59: #{tpu_custom_call.1} parent=39 // pred_region
          %v1233 = vld [vmem:[#allocation9] sm:$0xff]
          %v1234 = vld [vmem:[#allocation9 + $0x8] sm:$0xff]
          %v1235 = vld [vmem:[#allocation9 + $0x10] sm:$0xff]
          %v1236 = vld [vmem:[#allocation9 + $0x18] sm:$0xff]
          %v1237 = vld [vmem:[#allocation9 + $0x20] sm:$0xff]
          %v1238 = vld [vmem:[#allocation9 + $0x28] sm:$0xff]
          %v1239 = vld [vmem:[#allocation9 + $0x30] sm:$0xff]
          %v1240 = vld [vmem:[#allocation9 + $0x38] sm:$0xff]
          %v1241 = vld [vmem:[#allocation9 + $0x40] sm:$0xff]
          %v1242 = vld [vmem:[#allocation9 + $0x48] sm:$0xff]
          %v1243 = vld [vmem:[#allocation9 + $0x50] sm:$0xff]
          %v1244 = vld [vmem:[#allocation9 + $0x58] sm:$0xff]
          %v1245 = vld [vmem:[#allocation9 + $0x60] sm:$0xff]
          %v1246 = vld [vmem:[#allocation9 + $0x68] sm:$0xff]
          %v1247 = vld [vmem:[#allocation9 + $0x70] sm:$0xff]
          %v1248 = vld [vmem:[#allocation9 + $0x78] sm:$0xff]
          %v1249 = vld [vmem:[#allocation3] sm:$0xff]
          %v1250 = vld [vmem:[#allocation3 + $0x8] sm:$0xff]
          %v1251 = vld [vmem:[#allocation3 + $0x10] sm:$0xff]
          %v1252 = vld [vmem:[#allocation3 + $0x18] sm:$0xff]
          %v1253 = vld [vmem:[#allocation3 + $0x20] sm:$0xff]
          %v1254 = vld [vmem:[#allocation3 + $0x28] sm:$0xff]
          %v1255 = vld [vmem:[#allocation3 + $0x30] sm:$0xff]
          %v1256 = vld [vmem:[#allocation3 + $0x38] sm:$0xff]
          %v1257 = vld [vmem:[#allocation3 + $0x40] sm:$0xff]
          %v1258 = vld [vmem:[#allocation3 + $0x48] sm:$0xff]
          %v1259 = vld [vmem:[#allocation3 + $0x50] sm:$0xff]
          %v1260 = vld [vmem:[#allocation3 + $0x58] sm:$0xff]
          %v1261 = vld [vmem:[#allocation3 + $0x60] sm:$0xff]
          %v1262 = vld [vmem:[#allocation3 + $0x68] sm:$0xff]
          %v1263 = vld [vmem:[#allocation3 + $0x70] sm:$0xff]
          %v1264 = vld [vmem:[#allocation3 + $0x78] sm:$0xff]
          %v1265 = vld [vmem:[%s4] sm:$0xff]
          %v1266 = vld [vmem:[%s4 + $0x8] sm:$0xff]
          %v1267 = vld [vmem:[%s4 + $0x10] sm:$0xff]
          %v1268 = vld [vmem:[%s4 + $0x18] sm:$0xff]
          %v1269 = vld [vmem:[%s4 + $0x20] sm:$0xff]
          %v1270 = vld [vmem:[%s4 + $0x28] sm:$0xff]
          %v1271 = vld [vmem:[%s4 + $0x30] sm:$0xff]
          %v1272 = vld [vmem:[%s4 + $0x38] sm:$0xff]
          %v1273 = vld [vmem:[%s4 + $0x40] sm:$0xff]
          %v1274 = vld [vmem:[%s4 + $0x48] sm:$0xff]
          %v1275 = vld [vmem:[%s4 + $0x50] sm:$0xff]
          %v1276 = vld [vmem:[%s4 + $0x58] sm:$0xff]
          %v1277 = vld [vmem:[%s4 + $0x60] sm:$0xff]
          %v1278 = vld [vmem:[%s4 + $0x68] sm:$0xff]
          %v1279 = vld [vmem:[%s4 + $0x70] sm:$0xff]
          %v1280 = vld [vmem:[%s4 + $0x78] sm:$0xff]
          %1282 = vset.pattern.permute.xlu0 0
          %1283 = vperm.xlu0 %1282, %v1265
          %v1284 = vpop.permute.xlu0 %1283
          %1287 = vset.pattern.permute.xlu0 0
          %1288 = vperm.xlu0 %1287, %v1266
          %v1289 = vpop.permute.xlu0 %1288
          %1292 = vset.pattern.permute.xlu0 0
          %1293 = vperm.xlu0 %1292, %v1267
          %v1294 = vpop.permute.xlu0 %1293
          %1297 = vset.pattern.permute.xlu0 0
          %1298 = vperm.xlu0 %1297, %v1268
          %v1299 = vpop.permute.xlu0 %1298
          %1302 = vset.pattern.permute.xlu0 0
          %1303 = vperm.xlu0 %1302, %v1269
          %v1304 = vpop.permute.xlu0 %1303
          %1307 = vset.pattern.permute.xlu0 0
          %1308 = vperm.xlu0 %1307, %v1270
          %v1309 = vpop.permute.xlu0 %1308
          %1312 = vset.pattern.permute.xlu0 0
          %1313 = vperm.xlu0 %1312, %v1271
          %v1314 = vpop.permute.xlu0 %1313
          %1317 = vset.pattern.permute.xlu0 0
          %1318 = vperm.xlu0 %1317, %v1272
          %v1319 = vpop.permute.xlu0 %1318
          %1322 = vset.pattern.permute.xlu0 0
          %1323 = vperm.xlu0 %1322, %v1273
          %v1324 = vpop.permute.xlu0 %1323
          %1327 = vset.pattern.permute.xlu0 0
          %1328 = vperm.xlu0 %1327, %v1274
          %v1329 = vpop.permute.xlu0 %1328
          %1332 = vset.pattern.permute.xlu0 0
          %1333 = vperm.xlu0 %1332, %v1275
          %v1334 = vpop.permute.xlu0 %1333
          %1337 = vset.pattern.permute.xlu0 0
          %1338 = vperm.xlu0 %1337, %v1276
          %v1339 = vpop.permute.xlu0 %1338
          %1342 = vset.pattern.permute.xlu0 0
          %1343 = vperm.xlu0 %1342, %v1277
          %v1344 = vpop.permute.xlu0 %1343
          %1347 = vset.pattern.permute.xlu0 0
          %1348 = vperm.xlu0 %1347, %v1278
          %v1349 = vpop.permute.xlu0 %1348
          %1352 = vset.pattern.permute.xlu0 0
          %1353 = vperm.xlu0 %1352, %v1279
          %v1354 = vpop.permute.xlu0 %1353
          %1357 = vset.pattern.permute.xlu0 0
          %1358 = vperm.xlu0 %1357, %v1280
          %v1359 = vpop.permute.xlu0 %1358
          %1361 = vmatprep.subr.mxu0 0.0
          %1362 = vmatpush1.msra.mxu0 %v1249
          %1363 = vmatprep.subr.mxu0 0.0
          %1364 = vmatpush1.msra.mxu0 %v1250
          %1365 = vmatprep.subr.mxu0 0.0
          %1366 = vmatpush1.msra.mxu0 %v1251
          %1367 = vmatprep.subr.mxu0 0.0
          %1368 = vmatpush1.msra.mxu0 %v1252
          %1369 = vmatprep.subr.mxu0 0.0
          %1370 = vmatpush1.msra.mxu0 %v1253
          %1371 = vmatprep.subr.mxu0 0.0
          %1372 = vmatpush1.msra.mxu0 %v1254
          %1373 = vmatprep.subr.mxu0 0.0
          %1374 = vmatpush1.msra.mxu0 %v1255
          %1375 = vmatprep.subr.mxu0 0.0
          %1376 = vmatpush1.msra.mxu0 %v1256
          %1377 = vmatprep.subr.mxu0 0.0
          %1378 = vmatpush1.msra.mxu0 %v1257
          %1379 = vmatprep.subr.mxu0 0.0
          %1380 = vmatpush1.msra.mxu0 %v1258
          %1381 = vmatprep.subr.mxu0 0.0
          %1382 = vmatpush1.msra.mxu0 %v1259
          %1383 = vmatprep.subr.mxu0 0.0
          %1384 = vmatpush1.msra.mxu0 %v1260
          %1385 = vmatprep.subr.mxu0 0.0
          %1386 = vmatpush1.msra.mxu0 %v1261
          %1387 = vmatprep.subr.mxu0 0.0
          %1388 = vmatpush1.msra.mxu0 %v1262
          %1389 = vmatprep.subr.mxu0 0.0
          %1390 = vmatpush1.msra.mxu0 %v1263
          %1391 = vmatprep.subr.mxu0 0.0
          %1392 = vmatpush1.msra.mxu0 %v1264
          %1393 = vmatprep.subr.mxu0 0.0
          %1394 = vmatpush1.msra.mxu0 0.0
          %1395 = vmatprep.subr.mxu0 0.0
          %1396 = vmatpush1.msra.mxu0 0.0
          %1397 = vmatprep.subr.mxu0 0.0
          %1398 = vmatpush1.msra.mxu0 0.0
          %1399 = vmatprep.subr.mxu0 0.0
          %1400 = vmatpush1.msra.mxu0 0.0
          %1401 = vmatprep.subr.mxu0 0.0
          %1402 = vmatpush1.msra.mxu0 0.0
          %1403 = vmatprep.subr.mxu0 0.0
          %1404 = vmatpush1.msra.mxu0 0.0
          %1405 = vmatprep.subr.mxu0 0.0
          %1406 = vmatpush1.msra.mxu0 0.0
          %1407 = vmatprep.subr.mxu0 0.0
          %1408 = vmatpush1.msra.mxu0 0.0
          %1409 = vmatprep.subr.mxu0 0.0
          %1410 = vmatpush1.msra.mxu0 0.0
          %1411 = vmatprep.subr.mxu0 0.0
          %1412 = vmatpush1.msra.mxu0 0.0
          %1413 = vmatprep.subr.mxu0 0.0
          %1414 = vmatpush1.msra.mxu0 0.0
          %1415 = vmatprep.subr.mxu0 0.0
          %1416 = vmatpush1.msra.mxu0 0.0
          %1417 = vmatprep.subr.mxu0 0.0
          %1418 = vmatpush1.msra.mxu0 0.0
          %1419 = vmatprep.subr.mxu0 0.0
          %1420 = vmatpush1.msra.mxu0 0.0
          %1421 = vmatprep.subr.mxu0 0.0
          %1422 = vmatpush1.msra.mxu0 0.0
          %1423 = vmatprep.subr.mxu0 0.0
          %1424 = vmatpush1.msra.mxu0 0.0
          %1425 = vmatprep.mubr.f32.mxu0 0.0
          %1426 = vmatmul.mubr.f32.gmra.mrb[0].mxu0 %v1233
          %v1427 = vpop.f32.mrb[0].mxu0
          %v1428 = vadd.f32 %v1284, %v1427
          %v1429 = vpop.f32.mrb[0].mxu0
          %1430 = vmatprep.mubr.f32.mxu0 0.0
          %1431 = vmatmul.mubr.f32.gmra.mrb[0].mxu0 %v1234
          %v1432 = vpop.f32.mrb[0].mxu0
          %v1433 = vadd.f32 %v1289, %v1432
          %v1434 = vpop.f32.mrb[0].mxu0
          %1435 = vmatprep.mubr.f32.mxu0 0.0
          %1436 = vmatmul.mubr.f32.gmra.mrb[0].mxu0 %v1235
          %v1437 = vpop.f32.mrb[0].mxu0
          %v1438 = vadd.f32 %v1294, %v1437
          %v1439 = vpop.f32.mrb[0].mxu0
          %1440 = vmatprep.mubr.f32.mxu0 0.0
          %1441 = vmatmul.mubr.f32.gmra.mrb[0].mxu0 %v1236
          %v1442 = vpop.f32.mrb[0].mxu0
          %v1443 = vadd.f32 %v1299, %v1442
          %v1444 = vpop.f32.mrb[0].mxu0
          %1445 = vmatprep.mubr.f32.mxu0 0.0
          %1446 = vmatmul.mubr.f32.gmra.mrb[0].mxu0 %v1237
          %v1447 = vpop.f32.mrb[0].mxu0
          %v1448 = vadd.f32 %v1304, %v1447
          %v1449 = vpop.f32.mrb[0].mxu0
          %1450 = vmatprep.mubr.f32.mxu0 0.0
          %1451 = vmatmul.mubr.f32.gmra.mrb[0].mxu0 %v1238
          %v1452 = vpop.f32.mrb[0].mxu0
          %v1453 = vadd.f32 %v1309, %v1452
          %v1454 = vpop.f32.mrb[0].mxu0
          %1455 = vmatprep.mubr.f32.mxu0 0.0
          %1456 = vmatmul.mubr.f32.gmra.mrb[0].mxu0 %v1239
          %v1457 = vpop.f32.mrb[0].mxu0
          %v1458 = vadd.f32 %v1314, %v1457
          %v1459 = vpop.f32.mrb[0].mxu0
          %1460 = vmatprep.mubr.f32.mxu0 0.0
          %1461 = vmatmul.mubr.f32.gmra.mrb[0].mxu0 %v1240
          %v1462 = vpop.f32.mrb[0].mxu0
          %v1463 = vadd.f32 %v1319, %v1462
          %v1464 = vpop.f32.mrb[0].mxu0
          %1465 = vmatprep.mubr.f32.mxu0 0.0
          %1466 = vmatmul.mubr.f32.gmra.mrb[0].mxu0 %v1241
          %v1467 = vpop.f32.mrb[0].mxu0
          %v1468 = vadd.f32 %v1324, %v1467
          %v1469 = vpop.f32.mrb[0].mxu0
          %1470 = vmatprep.mubr.f32.mxu0 0.0
          %1471 = vmatmul.mubr.f32.gmra.mrb[0].mxu0 %v1242
          %v1472 = vpop.f32.mrb[0].mxu0
          %v1473 = vadd.f32 %v1329, %v1472
          %v1474 = vpop.f32.mrb[0].mxu0
          %1475 = vmatprep.mubr.f32.mxu0 0.0
          %1476 = vmatmul.mubr.f32.gmra.mrb[0].mxu0 %v1243
          %v1477 = vpop.f32.mrb[0].mxu0
          %v1478 = vadd.f32 %v1334, %v1477
          %v1479 = vpop.f32.mrb[0].mxu0
          %1480 = vmatprep.mubr.f32.mxu0 0.0
          %1481 = vmatmul.mubr.f32.gmra.mrb[0].mxu0 %v1244
          %v1482 = vpop.f32.mrb[0].mxu0
          %v1483 = vadd.f32 %v1339, %v1482
          %v1484 = vpop.f32.mrb[0].mxu0
          %1485 = vmatprep.mubr.f32.mxu0 0.0
          %1486 = vmatmul.mubr.f32.gmra.mrb[0].mxu0 %v1245
          %v1487 = vpop.f32.mrb[0].mxu0
          %v1488 = vadd.f32 %v1344, %v1487
          %v1489 = vpop.f32.mrb[0].mxu0
          %1490 = vmatprep.mubr.f32.mxu0 0.0
          %1491 = vmatmul.mubr.f32.gmra.mrb[0].mxu0 %v1246
          %v1492 = vpop.f32.mrb[0].mxu0
          %v1493 = vadd.f32 %v1349, %v1492
          %v1494 = vpop.f32.mrb[0].mxu0
          %1495 = vmatprep.mubr.f32.mxu0 0.0
          %1496 = vmatmul.mubr.f32.gmra.mrb[0].mxu0 %v1247
          %v1497 = vpop.f32.mrb[0].mxu0
          %v1498 = vadd.f32 %v1354, %v1497
          %v1499 = vpop.f32.mrb[0].mxu0
          %1500 = vmatprep.mubr.f32.mxu0 0.0
          %1501 = vmatmul.mubr.f32.gmra.mrb[0].mxu0 %v1248
          %v1502 = vpop.f32.mrb[0].mxu0
          %v1503 = vadd.f32 %v1359, %v1502
          %v1504 = vpop.f32.mrb[0].mxu0
          %1505 = vdwg.mxu0
          %1506 = vst [vmem:[%s283] sm:$0xff] %v1428
          %1507 = vst [vmem:[%s283 + $0x8] sm:$0xff] %v1433
          %1508 = vst [vmem:[%s283 + $0x10] sm:$0xff] %v1438
          %1509 = vst [vmem:[%s283 + $0x18] sm:$0xff] %v1443
          %1510 = vst [vmem:[%s283 + $0x20] sm:$0xff] %v1448
          %1511 = vst [vmem:[%s283 + $0x28] sm:$0xff] %v1453
          %1512 = vst [vmem:[%s283 + $0x30] sm:$0xff] %v1458
          %1513 = vst [vmem:[%s283 + $0x38] sm:$0xff] %v1463
          %1514 = vst [vmem:[%s283 + $0x40] sm:$0xff] %v1468
          %1515 = vst [vmem:[%s283 + $0x48] sm:$0xff] %v1473
          %1516 = vst [vmem:[%s283 + $0x50] sm:$0xff] %v1478
          %1517 = vst [vmem:[%s283 + $0x58] sm:$0xff] %v1483
          %1518 = vst [vmem:[%s283 + $0x60] sm:$0xff] %v1488
          %1519 = vst [vmem:[%s283 + $0x68] sm:$0xff] %v1493
          %1520 = vst [vmem:[%s283 + $0x70] sm:$0xff] %v1498
          %1521 = vst [vmem:[%s283 + $0x78] sm:$0xff] %v1503
        $region60: #{tpu_custom_call.1} parent=39 // pred_fallthru
          _
        %s1522 = sand.u32 %s153, 1
        %s1523 = scalar_lea.sflag [#allocation6], %s1522
        %s1524 = sand.u32 %s153, 1
        %s1525 = smul.addr %s1524, 128
        %s1526 = scalar_lea.vmem [#allocation10], %s1525
        // Predicated region
        $region61: #{tpu_custom_call.1} parent=39 // pred_check
          %p1527 = pneg %p163
        $region62: #{tpu_custom_call.1} parent=39 // pred_check_branch
          %1529 = sbr.rel (%p1527) target = $region64
        $region63: #{tpu_custom_call.1} parent=39 // pred_region
          %s1531 = ssub.s32 2048, 2048
          %1532 = vsyncadd %s1523, %s1531
          %s1533 = smul.addr %s27, 16
          %s1534 = smul.addr %s1533, 128
          %s1535 = scalar_lea.hbm %s5, %s1534
          %s1536 = sshll.u32 %s1526, 4
          %s1537 = int_to_ptr.vmem [resolvable:$true] %s1536
          %1542 = dma.vmem_to_hbm [thread:$0]  %s1537, 2048, %s1535, %s1523, 128, 128, 8
        $region64: #{tpu_custom_call.1} parent=39 // pred_fallthru
          _
      $region40: #{tpu_custom_call.1} parent=5 // pred_fallthru
        _
      %p1543 = scmp.le.s32.totalorder 2, %s18
      // Predicated region
      $region65: #{tpu_custom_call.1} parent=5 // pred_check
        %p1544 = pneg %p1543
      $region66: #{tpu_custom_call.1} parent=5 // pred_check_branch
        %1546 = sbr.rel (%p1544) target = $region68
      $region67: #{tpu_custom_call.1} parent=5 // pred_region
        %s1547 = ssub.s32 %s18, 2
        // Predicated region
        $region69: #{tpu_custom_call.1} parent=67 // pred_check
          %p1548 = pneg %p169
        $region70: #{tpu_custom_call.1} parent=67 // pred_check_branch
          %1550 = sbr.rel (%p1548) target = $region72
        $region71: #{tpu_custom_call.1} parent=67 // pred_region
          %s1551 = sand.u32 %s154, 1
          %s1552 = scalar_lea.sflag [#allocation6], %s1551
          %s1553 = sand.u32 %s154, 1
          %s1554 = smul.addr %s1553, 128
          %s1555 = scalar_lea.vmem [#allocation10], %s1554
          %1556 = dma.done %s1552, 2048
        $region72: #{tpu_custom_call.1} parent=67 // pred_fallthru
          _
      $region68: #{tpu_custom_call.1} parent=5 // pred_fallthru
        _
    $region6: #{tpu_custom_call.1} parent=1 // loop_footer
      %s22 = sadd.s32 1, %s18
    $region7: #{tpu_custom_call.1} parent=1 // loop_footer_branch
      %17 = sbr.rel target = $region3
    $region8: #{tpu_custom_call.1} parent=1 // loop_exit
      _
    %1557 = vsyncpa [#allocation5], 1
    %s1558 = scalar_lea.sflag [#allocation5], 1
    %1559 = vsyncpa %s1558, 1
    %1560 = vsyncpa [#allocation8], 1
    %1561 = vsyncpa [#allocation6], 1
    %s1562 = scalar_lea.sflag [#allocation6], 1
    %1563 = vsyncpa %s1562, 1

</llo_original>
